<compile_context>
chip_gen: v7x
topology: tpu7x:2x2x1
jax: 0.10.0
libtpu: 0.0.40
codegen_flags: <defaults>
</compile_context>

<pallas_src>
import functools

import jax
import jax.numpy as jnp
import numpy as np
from jax.experimental import pallas as pl
from jax.experimental.pallas import tpu as pltpu

NUM_CHANNELS = [16, 32, 64]
FORECAST_HORIZON = 3
KERNEL_SIZE = 2


def _round_up(v, m):
    return (v + m - 1) // m * m


# ---------------------------------------------------------------------------
# Fused kernel: one grid step = one full TCN stack (3 TemporalBlocks) + its
# half of the final Linear, on a (C, B*L) lane-packed activation tile.
# ---------------------------------------------------------------------------
def _bidir_tcn_kernel(*refs, dilations):
    num_layers = len(dilations)
    t_ref, sel_ref, x_ref = refs[0], refs[1], refs[2]
    layer_refs = refs[3:3 + 4 * num_layers]
    wlin_ref = refs[3 + 4 * num_layers]
    o_ref = refs[-1]

    t_in_seq = t_ref[...]                                  # (1, B*L) int32
    # Hoisted per-dilation causal masks: zero the first d steps of each
    # length-L segment after the lane roll (kills cross-segment wraparound).
    masks = {d: (t_in_seq >= d).astype(jnp.float32)
             for d in sorted(set(dilations))}

    def causal_shift(v, d):        # out[:, t] = v[:, t-d], 0 for t < d (per segment)
        return pltpu.roll(v, shift=d, axis=1) * masks[d]

    h = x_ref[0]                                           # (Cin_pad, B*L) f32
    for i, d in enumerate(dilations):
        w_a = layer_refs[4 * i + 0][0]                     # (2*Cout, 2*Cin)
        b_a = layer_refs[4 * i + 1][0]                     # (2*Cout, 1)
        w_b = layer_refs[4 * i + 2][0]                     # (Cout, 2*Cout)
        b_b = layer_refs[4 * i + 3][0]                     # (Cout, 1)
        cout = w_b.shape[0]

        # conv1 (both taps) + 1x1 residual conv in ONE MXU op.
        xa = jnp.concatenate([causal_shift(h, d), h], axis=0)
        y = jnp.dot(w_a, xa, preferred_element_type=jnp.float32) + b_a
        h1 = jnp.maximum(y[:cout], 0.0)                    # relu1(conv1)
        res = y[cout:]                                     # residual path (no relu)

        # conv2 (both taps) in one MXU op.
        xb = jnp.concatenate([causal_shift(h1, d), h1], axis=0)
        h2 = jnp.maximum(
            jnp.dot(w_b, xb, preferred_element_type=jnp.float32) + b_b, 0.0)

        h = h2 + res            # block output (no extra ReLU — matches reference)

    # Last timestep of each batch segment (one-hot matmul -> no lane relayout),
    # then this direction's half of the final Linear.
    feat = jnp.dot(h, sel_ref[...], preferred_element_type=jnp.float32)   # (C, B)
    o_ref[0] = jnp.dot(wlin_ref[0], feat, preferred_element_type=jnp.float32)


# ---------------------------------------------------------------------------
# Parameter fusion (wrapper-side glue, runs once under jit)
# ---------------------------------------------------------------------------
def _fuse_block_params(blocks, in_rows):
    """Build per-block stacked matmul operands.

    w_a: (2*Cout, 2*in_rows) = [[w1_tap0, w1_tap1], [0, w_res]]
    b_a: (2*Cout, 1)         = [b1; b_res]
    w_b: (Cout, 2*Cout)      = [w2_tap0, w2_tap1]
    b_b: (Cout, 1)
    Input-channel dims are zero padded up to in_rows[i] (multiple of 8).
    """
    w_a, b_a, w_b, b_b = [], [], [], []
    for p, rows in zip(blocks, in_rows):
        w1, w2, wn = p["w1"], p["w2"], p["wn"]
        cout, cin, _ = w1.shape
        pad = ((0, 0), (0, rows - cin))
        top = jnp.concatenate([jnp.pad(w1[:, :, 0], pad),
                               jnp.pad(w1[:, :, 1], pad)], axis=1)
        bot = jnp.concatenate([jnp.zeros((cout, rows), jnp.float32),
                               jnp.pad(wn[:, :, 0], pad)], axis=1)
        w_a.append(jnp.concatenate([top, bot], axis=0))
        b_a.append(jnp.concatenate([p["b1"], p["bn"]]).reshape(2 * cout, 1))
        w_b.append(jnp.concatenate([w2[:, :, 0], w2[:, :, 1]], axis=1))
        b_b.append(p["b2"].reshape(cout, 1))
    return w_a, b_a, w_b, b_b


def bidirectional_tcn(x, params):
    """x: (B, num_inputs, L) f32 -> (B, FORECAST_HORIZON, num_inputs) f32."""
    B, cin, L = x.shape
    N = B * L
    c_last = NUM_CHANNELS[-1]
    f_out = params["final_w"].shape[0]
    dilations = tuple(2 ** i for i in range(len(NUM_CHANNELS)))
    cin_pad = _round_up(cin, 8)                  # keep sublane concats aligned
    in_rows = [cin_pad] + NUM_CHANNELS[:-1]

    # Input packing: (B, Cin, L) -> (2, Cin_pad, B*L); the backward copy is
    # time-reversed here (one tiny fused XLA op, no separate HBM flip pass).
    xt = jnp.pad(jnp.swapaxes(x, 0, 1), ((0, cin_pad - cin), (0, 0), (0, 0)))
    x_packed = jnp.stack([xt.reshape(cin_pad, N),
                          jnp.flip(xt, axis=-1).reshape(cin_pad, N)], axis=0)

    # Hoisted helpers: within-segment time index + last-timestep picker.
    t_in_seq = (jnp.arange(N, dtype=jnp.int32) % L).reshape(1, N)
    sel = jnp.zeros((N, B), jnp.float32).at[
        jnp.arange(B) * L + (L - 1), jnp.arange(B)].set(1.0)

    # Stack forward/backward parameters along a leading direction axis.
    fwd = _fuse_block_params(params["forward"], in_rows)
    bwd = _fuse_block_params(params["backward"], in_rows)
    stacked = []
    for i in range(len(NUM_CHANNELS)):
        for kind in range(4):
            stacked.append(jnp.stack([fwd[kind][i], bwd[kind][i]], axis=0))
    w_lin = jnp.stack([params["final_w"][:, :c_last],
                       params["final_w"][:, c_last:]], axis=0)   # (2, Fout, C)

    def dir_spec(shape):
        nd = len(shape)
        return pl.BlockSpec((1,) + tuple(shape[1:]),
                            lambda d: (d,) + (0,) * (nd - 1))

    partials = pl.pallas_call(
        functools.partial(_bidir_tcn_kernel, dilations=dilations),
        out_shape=jax.ShapeDtypeStruct((2, f_out, B), jnp.float32),
        grid=(2,),
        in_specs=[
            pl.BlockSpec((1, N), lambda d: (0, 0)),     # t_in_seq (shared)
            pl.BlockSpec((N, B), lambda d: (0, 0)),     # last-step picker (shared)
            dir_spec(x_packed.shape),                   # packed/flipped input
            *[dir_spec(w.shape) for w in stacked],      # per-layer fused weights
            dir_spec(w_lin.shape),                      # final-linear half
        ],
        out_specs=dir_spec((2, f_out, B)),
        compiler_params=pltpu.CompilerParams(
            dimension_semantics=("parallel",)),         # fwd/bwd across v7x TCs
    )(t_in_seq, sel, x_packed, *stacked, w_lin)

    out = partials[0] + partials[1] + params["final_b"][:, None]   # (Fout, B)
    return out.T.reshape(B, FORECAST_HORIZON, -1)


# ---------------------------------------------------------------------------
# Deterministic parameter initialization (PyTorch-like uniform bounds)
# ---------------------------------------------------------------------------
def init_params(key, num_inputs):
    def conv_init(k, cout, cin, ks):
        bound = (cin * ks) ** -0.5
        k1, k2 = jax.random.split(k)
        w = jax.random.uniform(k1, (cout, cin, ks), jnp.float32, -bound, bound)
        b = jax.random.uniform(k2, (cout,), jnp.float32, -bound, bound)
        return w, b

    def tcn_params(k):
        blocks = []
        for i, cout in enumerate(NUM_CHANNELS):
            cin = num_inputs if i == 0 else NUM_CHANNELS[i - 1]
            k, k1, k2, k3 = jax.random.split(k, 4)
            w1, b1 = conv_init(k1, cout, cin, KERNEL_SIZE)
            w2, b2 = conv_init(k2, cout, cout, KERNEL_SIZE)
            wn, bn = conv_init(k3, cout, cin, 1)
            blocks.append(dict(w1=w1, b1=b1, w2=w2, b2=b2, wn=wn, bn=bn))
        return blocks

    kf, kb, kl = jax.random.split(key, 3)
    fin = NUM_CHANNELS[-1] * 2
    fout = num_inputs * FORECAST_HORIZON
    bound = fin ** -0.5
    k1, k2 = jax.random.split(kl)
    return dict(
        forward=tcn_params(kf),
        backward=tcn_params(kb),
        final_w=jax.random.uniform(k1, (fout, fin), jnp.float32, -bound, bound),
        final_b=jax.random.uniform(k2, (fout,), jnp.float32, -bound, bound),
    )


# ---------------------------------------------------------------------------
# Pure-JAX reference (mirrors the PyTorch module) for a correctness check
# ---------------------------------------------------------------------------
def _ref_conv1d(x, w, b, dilation, padding):
    y = jax.lax.conv_general_dilated(
        x, w, window_strides=(1,), padding=[(padding, padding)],
        rhs_dilation=(dilation,), dimension_numbers=("NCH", "OIH", "NCH"))
    return y + b[None, :, None]


def _ref_bidirectional_tcn(x, params):
    def block(h, p, d):
        L = h.shape[2]
        pad = (KERNEL_SIZE - 1) * d
        out = jax.nn.relu(_ref_conv1d(h, p["w1"], p["b1"], d, pad))
        out = jax.nn.relu(_ref_conv1d(out, p["w2"], p["b2"], d, pad))
        return out[:, :, :L] + _ref_conv1d(h, p["wn"], p["bn"], 1, 0)

    def tcn(h, blocks):
        for i, p in enumerate(blocks):
            h = block(h, p, 2 ** i)
        return h

    f = tcn(x, params["forward"])
    b = tcn(jnp.flip(x, axis=2), params["backward"])
    feat = jnp.concatenate([f[:, :, -1], b[:, :, -1]], axis=1)
    out = feat @ params["final_w"].T + params["final_b"]
    return out.reshape(x.shape[0], FORECAST_HORIZON, -1)


if __name__ == "__main__":
    num_inputs = 4
    B, L = 2, 16

    key = jax.random.PRNGKey(0)
    kx, kp = jax.random.split(key)
    x = jax.random.normal(kx, (B, num_inputs, L), jnp.float32)
    params = init_params(kp, num_inputs)

    out = jax.jit(lambda xx: bidirectional_tcn(xx, params))(x)
    jax.block_until_ready(out)
    assert out.shape == (B, FORECAST_HORIZON, num_inputs), out.shape

    ref = _ref_bidirectional_tcn(x, params)
    np.testing.assert_allclose(np.asarray(out), np.asarray(ref),
                               rtol=2e-2, atol=2e-2)
    print("KERNEL_OK")
</pallas_src>

<mosaic_0001>
module attributes {stable_mosaic.version = 11 : i64} {
  func.func @_bidir_tcn_kernel(%arg0: i32, %arg1: memref<1x32xi32, #tpu.memory_space<vmem>>, %arg2: memref<32x2xf32, #tpu.memory_space<vmem>>, %arg3: memref<1x8x32xf32, #tpu.memory_space<vmem>>, %arg4: memref<1x32x16xf32, #tpu.memory_space<vmem>>, %arg5: memref<1x32x1xf32, #tpu.memory_space<vmem>>, %arg6: memref<1x16x32xf32, #tpu.memory_space<vmem>>, %arg7: memref<1x16x1xf32, #tpu.memory_space<vmem>>, %arg8: memref<1x64x32xf32, #tpu.memory_space<vmem>>, %arg9: memref<1x64x1xf32, #tpu.memory_space<vmem>>, %arg10: memref<1x32x64xf32, #tpu.memory_space<vmem>>, %arg11: memref<1x32x1xf32, #tpu.memory_space<vmem>>, %arg12: memref<1x128x64xf32, #tpu.memory_space<vmem>>, %arg13: memref<1x128x1xf32, #tpu.memory_space<vmem>>, %arg14: memref<1x64x128xf32, #tpu.memory_space<vmem>>, %arg15: memref<1x64x1xf32, #tpu.memory_space<vmem>>, %arg16: memref<1x12x64xf32, #tpu.memory_space<vmem>>, %arg17: memref<1x12x2xf32, #tpu.memory_space<vmem>>) attributes {dimension_semantics = [#tpu.dimension_semantics<parallel>], iteration_bounds = array<i64: 2>, scalar_prefetch = 0 : i64, scratch_operands = 0 : i64, tpu.core_type = #tpu.core_type<tc>, window_params = [{pipeline_mode = #tpu.pipeline_mode<synchronous>, transform_indices = @transform_0, window_bounds = array<i64: 1, 32>}, {pipeline_mode = #tpu.pipeline_mode<synchronous>, transform_indices = @transform_1, window_bounds = array<i64: 32, 2>}, {transform_indices = @transform_2, window_bounds = array<i64: 1, 8, 32>}, {transform_indices = @transform_3, window_bounds = array<i64: 1, 32, 16>}, {transform_indices = @transform_4, window_bounds = array<i64: 1, 32, 1>}, {transform_indices = @transform_5, window_bounds = array<i64: 1, 16, 32>}, {transform_indices = @transform_6, window_bounds = array<i64: 1, 16, 1>}, {transform_indices = @transform_7, window_bounds = array<i64: 1, 64, 32>}, {transform_indices = @transform_8, window_bounds = array<i64: 1, 64, 1>}, {transform_indices = @transform_9, window_bounds = array<i64: 1, 32, 64>}, {transform_indices = @transform_10, window_bounds = array<i64: 1, 32, 1>}, {transform_indices = @transform_11, window_bounds = array<i64: 1, 128, 64>}, {transform_indices = @transform_12, window_bounds = array<i64: 1, 128, 1>}, {transform_indices = @transform_13, window_bounds = array<i64: 1, 64, 128>}, {transform_indices = @transform_14, window_bounds = array<i64: 1, 64, 1>}, {transform_indices = @transform_15, window_bounds = array<i64: 1, 12, 64>}, {transform_indices = @transform_16, window_bounds = array<i64: 1, 12, 2>}]} {
    %c0 = arith.constant 0 : index
    %c0_0 = arith.constant 0 : index
    %0 = vector.load %arg1[%c0, %c0_0] : memref<1x32xi32, #tpu.memory_space<vmem>>, vector<1x32xi32>
    %c1_i32 = arith.constant 1 : i32
    %1 = vector.broadcast %c1_i32 : i32 to vector<1x32xi32>
    %2 = arith.cmpi sge, %0, %1 : vector<1x32xi32>
    %3 = arith.extui %2 : vector<1x32xi1> to vector<1x32xi32>
    %4 = arith.sitofp %3 : vector<1x32xi32> to vector<1x32xf32>
    %c2_i32 = arith.constant 2 : i32
    %5 = vector.broadcast %c2_i32 : i32 to vector<1x32xi32>
    %6 = arith.cmpi sge, %0, %5 : vector<1x32xi32>
    %7 = arith.extui %6 : vector<1x32xi1> to vector<1x32xi32>
    %8 = arith.sitofp %7 : vector<1x32xi32> to vector<1x32xf32>
    %c4_i32 = arith.constant 4 : i32
    %9 = vector.broadcast %c4_i32 : i32 to vector<1x32xi32>
    %10 = arith.cmpi sge, %0, %9 : vector<1x32xi32>
    %11 = arith.extui %10 : vector<1x32xi1> to vector<1x32xi32>
    %12 = arith.sitofp %11 : vector<1x32xi32> to vector<1x32xf32>
    %c0_1 = arith.constant 0 : index
    %c0_2 = arith.constant 0 : index
    %c0_3 = arith.constant 0 : index
    %13 = vector.load %arg3[%c0_1, %c0_2, %c0_3] : memref<1x8x32xf32, #tpu.memory_space<vmem>>, vector<1x8x32xf32>
    %14 = vector.shape_cast %13 : vector<1x8x32xf32> to vector<8x32xf32>
    %c0_4 = arith.constant 0 : index
    %c0_5 = arith.constant 0 : index
    %c0_6 = arith.constant 0 : index
    %15 = vector.load %arg4[%c0_4, %c0_5, %c0_6] : memref<1x32x16xf32, #tpu.memory_space<vmem>>, vector<1x32x16xf32>
    %16 = vector.shape_cast %15 : vector<1x32x16xf32> to vector<32x16xf32>
    %c0_7 = arith.constant 0 : index
    %c0_8 = arith.constant 0 : index
    %c0_9 = arith.constant 0 : index
    %17 = vector.load %arg5[%c0_7, %c0_8, %c0_9] : memref<1x32x1xf32, #tpu.memory_space<vmem>>, vector<1x32x1xf32>
    %18 = vector.shape_cast %17 : vector<1x32x1xf32> to vector<32x1xf32>
    %c0_10 = arith.constant 0 : index
    %c0_11 = arith.constant 0 : index
    %c0_12 = arith.constant 0 : index
    %19 = vector.load %arg6[%c0_10, %c0_11, %c0_12] : memref<1x16x32xf32, #tpu.memory_space<vmem>>, vector<1x16x32xf32>
    %20 = vector.shape_cast %19 : vector<1x16x32xf32> to vector<16x32xf32>
    %c0_13 = arith.constant 0 : index
    %c0_14 = arith.constant 0 : index
    %c0_15 = arith.constant 0 : index
    %21 = vector.load %arg7[%c0_13, %c0_14, %c0_15] : memref<1x16x1xf32, #tpu.memory_space<vmem>>, vector<1x16x1xf32>
    %22 = vector.shape_cast %21 : vector<1x16x1xf32> to vector<16x1xf32>
    %c1_i32_16 = arith.constant 1 : i32
    %23 = tpu.dynamic_rotate %14 by %c1_i32_16 dim 1 : vector<8x32xf32>, i32 -> vector<8x32xf32>
    %24 = vector.broadcast %4 : vector<1x32xf32> to vector<8x32xf32>
    %25 = arith.mulf %23, %24 : vector<8x32xf32>
    %26 = tpu.concatenate %25, %14 in 0 : vector<8x32xf32>, vector<8x32xf32> -> vector<16x32xf32>
    %cst = arith.constant dense<0.000000e+00> : vector<32x32xf32>
    %27 = tpu.matmul %16, %26, %cst {dimension_numbers = #tpu.dot_dimension_numbers<[1], [0], [0], [1], [0, 0, 1, 1], [], []>} : vector<32x16xf32>, vector<16x32xf32>, vector<32x32xf32> -> vector<32x32xf32>
    %28 = vector.broadcast %18 : vector<32x1xf32> to vector<32x32xf32>
    %29 = arith.addf %27, %28 : vector<32x32xf32>
    %30 = vector.extract_strided_slice %29 {offsets = [0, 0], sizes = [16, 32], strides = [1, 1]} : vector<32x32xf32> to vector<16x32xf32>
    %cst_17 = arith.constant 0.000000e+00 : f32
    %31 = vector.broadcast %cst_17 : f32 to vector<16x32xf32>
    %32 = arith.maximumf %30, %31 : vector<16x32xf32>
    %33 = vector.extract_strided_slice %29 {offsets = [16, 0], sizes = [16, 32], strides = [1, 1]} : vector<32x32xf32> to vector<16x32xf32>
    %c1_i32_18 = arith.constant 1 : i32
    %34 = tpu.dynamic_rotate %32 by %c1_i32_18 dim 1 : vector<16x32xf32>, i32 -> vector<16x32xf32>
    %35 = vector.broadcast %4 : vector<1x32xf32> to vector<16x32xf32>
    %36 = arith.mulf %34, %35 : vector<16x32xf32>
    %37 = tpu.concatenate %36, %32 in 0 : vector<16x32xf32>, vector<16x32xf32> -> vector<32x32xf32>
    %cst_19 = arith.constant dense<0.000000e+00> : vector<16x32xf32>
    %38 = tpu.matmul %20, %37, %cst_19 {dimension_numbers = #tpu.dot_dimension_numbers<[1], [0], [0], [1], [0, 0, 1, 1], [], []>} : vector<16x32xf32>, vector<32x32xf32>, vector<16x32xf32> -> vector<16x32xf32>
    %39 = vector.broadcast %22 : vector<16x1xf32> to vector<16x32xf32>
    %40 = arith.addf %38, %39 : vector<16x32xf32>
    %cst_20 = arith.constant 0.000000e+00 : f32
    %41 = vector.broadcast %cst_20 : f32 to vector<16x32xf32>
    %42 = arith.maximumf %40, %41 : vector<16x32xf32>
    %43 = arith.addf %42, %33 : vector<16x32xf32>
    %c0_21 = arith.constant 0 : index
    %c0_22 = arith.constant 0 : index
    %c0_23 = arith.constant 0 : index
    %44 = vector.load %arg8[%c0_21, %c0_22, %c0_23] : memref<1x64x32xf32, #tpu.memory_space<vmem>>, vector<1x64x32xf32>
    %45 = vector.shape_cast %44 : vector<1x64x32xf32> to vector<64x32xf32>
    %c0_24 = arith.constant 0 : index
    %c0_25 = arith.constant 0 : index
    %c0_26 = arith.constant 0 : index
    %46 = vector.load %arg9[%c0_24, %c0_25, %c0_26] : memref<1x64x1xf32, #tpu.memory_space<vmem>>, vector<1x64x1xf32>
    %47 = vector.shape_cast %46 : vector<1x64x1xf32> to vector<64x1xf32>
    %c0_27 = arith.constant 0 : index
    %c0_28 = arith.constant 0 : index
    %c0_29 = arith.constant 0 : index
    %48 = vector.load %arg10[%c0_27, %c0_28, %c0_29] : memref<1x32x64xf32, #tpu.memory_space<vmem>>, vector<1x32x64xf32>
    %49 = vector.shape_cast %48 : vector<1x32x64xf32> to vector<32x64xf32>
    %c0_30 = arith.constant 0 : index
    %c0_31 = arith.constant 0 : index
    %c0_32 = arith.constant 0 : index
    %50 = vector.load %arg11[%c0_30, %c0_31, %c0_32] : memref<1x32x1xf32, #tpu.memory_space<vmem>>, vector<1x32x1xf32>
    %51 = vector.shape_cast %50 : vector<1x32x1xf32> to vector<32x1xf32>
    %c2_i32_33 = arith.constant 2 : i32
    %52 = tpu.dynamic_rotate %43 by %c2_i32_33 dim 1 : vector<16x32xf32>, i32 -> vector<16x32xf32>
    %53 = vector.broadcast %8 : vector<1x32xf32> to vector<16x32xf32>
    %54 = arith.mulf %52, %53 : vector<16x32xf32>
    %55 = tpu.concatenate %54, %43 in 0 : vector<16x32xf32>, vector<16x32xf32> -> vector<32x32xf32>
    %cst_34 = arith.constant dense<0.000000e+00> : vector<64x32xf32>
    %56 = tpu.matmul %45, %55, %cst_34 {dimension_numbers = #tpu.dot_dimension_numbers<[1], [0], [0], [1], [0, 0, 1, 1], [], []>} : vector<64x32xf32>, vector<32x32xf32>, vector<64x32xf32> -> vector<64x32xf32>
    %57 = vector.broadcast %47 : vector<64x1xf32> to vector<64x32xf32>
    %58 = arith.addf %56, %57 : vector<64x32xf32>
    %59 = vector.extract_strided_slice %58 {offsets = [0, 0], sizes = [32, 32], strides = [1, 1]} : vector<64x32xf32> to vector<32x32xf32>
    %cst_35 = arith.constant 0.000000e+00 : f32
    %60 = vector.broadcast %cst_35 : f32 to vector<32x32xf32>
    %61 = arith.maximumf %59, %60 : vector<32x32xf32>
    %62 = vector.extract_strided_slice %58 {offsets = [32, 0], sizes = [32, 32], strides = [1, 1]} : vector<64x32xf32> to vector<32x32xf32>
    %c2_i32_36 = arith.constant 2 : i32
    %63 = tpu.dynamic_rotate %61 by %c2_i32_36 dim 1 : vector<32x32xf32>, i32 -> vector<32x32xf32>
    %64 = vector.broadcast %8 : vector<1x32xf32> to vector<32x32xf32>
    %65 = arith.mulf %63, %64 : vector<32x32xf32>
    %66 = tpu.concatenate %65, %61 in 0 : vector<32x32xf32>, vector<32x32xf32> -> vector<64x32xf32>
    %cst_37 = arith.constant dense<0.000000e+00> : vector<32x32xf32>
    %67 = tpu.matmul %49, %66, %cst_37 {dimension_numbers = #tpu.dot_dimension_numbers<[1], [0], [0], [1], [0, 0, 1, 1], [], []>} : vector<32x64xf32>, vector<64x32xf32>, vector<32x32xf32> -> vector<32x32xf32>
    %68 = vector.broadcast %51 : vector<32x1xf32> to vector<32x32xf32>
    %69 = arith.addf %67, %68 : vector<32x32xf32>
    %cst_38 = arith.constant 0.000000e+00 : f32
    %70 = vector.broadcast %cst_38 : f32 to vector<32x32xf32>
    %71 = arith.maximumf %69, %70 : vector<32x32xf32>
    %72 = arith.addf %71, %62 : vector<32x32xf32>
    %c0_39 = arith.constant 0 : index
    %c0_40 = arith.constant 0 : index
    %c0_41 = arith.constant 0 : index
    %73 = vector.load %arg12[%c0_39, %c0_40, %c0_41] : memref<1x128x64xf32, #tpu.memory_space<vmem>>, vector<1x128x64xf32>
    %74 = vector.shape_cast %73 : vector<1x128x64xf32> to vector<128x64xf32>
    %c0_42 = arith.constant 0 : index
    %c0_43 = arith.constant 0 : index
    %c0_44 = arith.constant 0 : index
    %75 = vector.load %arg13[%c0_42, %c0_43, %c0_44] : memref<1x128x1xf32, #tpu.memory_space<vmem>>, vector<1x128x1xf32>
    %76 = vector.shape_cast %75 : vector<1x128x1xf32> to vector<128x1xf32>
    %c0_45 = arith.constant 0 : index
    %c0_46 = arith.constant 0 : index
    %c0_47 = arith.constant 0 : index
    %77 = vector.load %arg14[%c0_45, %c0_46, %c0_47] : memref<1x64x128xf32, #tpu.memory_space<vmem>>, vector<1x64x128xf32>
    %78 = vector.shape_cast %77 : vector<1x64x128xf32> to vector<64x128xf32>
    %c0_48 = arith.constant 0 : index
    %c0_49 = arith.constant 0 : index
    %c0_50 = arith.constant 0 : index
    %79 = vector.load %arg15[%c0_48, %c0_49, %c0_50] : memref<1x64x1xf32, #tpu.memory_space<vmem>>, vector<1x64x1xf32>
    %80 = vector.shape_cast %79 : vector<1x64x1xf32> to vector<64x1xf32>
    %c4_i32_51 = arith.constant 4 : i32
    %81 = tpu.dynamic_rotate %72 by %c4_i32_51 dim 1 : vector<32x32xf32>, i32 -> vector<32x32xf32>
    %82 = vector.broadcast %12 : vector<1x32xf32> to vector<32x32xf32>
    %83 = arith.mulf %81, %82 : vector<32x32xf32>
    %84 = tpu.concatenate %83, %72 in 0 : vector<32x32xf32>, vector<32x32xf32> -> vector<64x32xf32>
    %cst_52 = arith.constant dense<0.000000e+00> : vector<128x32xf32>
    %85 = tpu.matmul %74, %84, %cst_52 {dimension_numbers = #tpu.dot_dimension_numbers<[1], [0], [0], [1], [0, 0, 1, 1], [], []>} : vector<128x64xf32>, vector<64x32xf32>, vector<128x32xf32> -> vector<128x32xf32>
    %86 = vector.broadcast %76 : vector<128x1xf32> to vector<128x32xf32>
    %87 = arith.addf %85, %86 : vector<128x32xf32>
    %88 = vector.extract_strided_slice %87 {offsets = [0, 0], sizes = [64, 32], strides = [1, 1]} : vector<128x32xf32> to vector<64x32xf32>
    %cst_53 = arith.constant 0.000000e+00 : f32
    %89 = vector.broadcast %cst_53 : f32 to vector<64x32xf32>
    %90 = arith.maximumf %88, %89 : vector<64x32xf32>
    %91 = vector.extract_strided_slice %87 {offsets = [64, 0], sizes = [64, 32], strides = [1, 1]} : vector<128x32xf32> to vector<64x32xf32>
    %c4_i32_54 = arith.constant 4 : i32
    %92 = tpu.dynamic_rotate %90 by %c4_i32_54 dim 1 : vector<64x32xf32>, i32 -> vector<64x32xf32>
    %93 = vector.broadcast %12 : vector<1x32xf32> to vector<64x32xf32>
    %94 = arith.mulf %92, %93 : vector<64x32xf32>
    %95 = tpu.concatenate %94, %90 in 0 : vector<64x32xf32>, vector<64x32xf32> -> vector<128x32xf32>
    %cst_55 = arith.constant dense<0.000000e+00> : vector<64x32xf32>
    %96 = tpu.matmul %78, %95, %cst_55 {dimension_numbers = #tpu.dot_dimension_numbers<[1], [0], [0], [1], [0, 0, 1, 1], [], []>} : vector<64x128xf32>, vector<128x32xf32>, vector<64x32xf32> -> vector<64x32xf32>
    %97 = vector.broadcast %80 : vector<64x1xf32> to vector<64x32xf32>
    %98 = arith.addf %96, %97 : vector<64x32xf32>
    %cst_56 = arith.constant 0.000000e+00 : f32
    %99 = vector.broadcast %cst_56 : f32 to vector<64x32xf32>
    %100 = arith.maximumf %98, %99 : vector<64x32xf32>
    %101 = arith.addf %100, %91 : vector<64x32xf32>
    %c0_57 = arith.constant 0 : index
    %c0_58 = arith.constant 0 : index
    %102 = vector.load %arg2[%c0_57, %c0_58] : memref<32x2xf32, #tpu.memory_space<vmem>>, vector<32x2xf32>
    %cst_59 = arith.constant dense<0.000000e+00> : vector<64x2xf32>
    %103 = tpu.matmul %101, %102, %cst_59 {dimension_numbers = #tpu.dot_dimension_numbers<[1], [0], [0], [1], [0, 0, 1, 1], [], []>} : vector<64x32xf32>, vector<32x2xf32>, vector<64x2xf32> -> vector<64x2xf32>
    %c0_60 = arith.constant 0 : index
    %c0_61 = arith.constant 0 : index
    %c0_62 = arith.constant 0 : index
    %104 = vector.load %arg16[%c0_60, %c0_61, %c0_62] : memref<1x12x64xf32, #tpu.memory_space<vmem>>, vector<1x12x64xf32>
    %105 = vector.shape_cast %104 : vector<1x12x64xf32> to vector<12x64xf32>
    %cst_63 = arith.constant dense<0.000000e+00> : vector<12x2xf32>
    %106 = tpu.matmul %105, %103, %cst_63 {dimension_numbers = #tpu.dot_dimension_numbers<[1], [0], [0], [1], [0, 0, 1, 1], [], []>} : vector<12x64xf32>, vector<64x2xf32>, vector<12x2xf32> -> vector<12x2xf32>
    %c0_64 = arith.constant 0 : index
    %c0_65 = arith.constant 0 : index
    %c0_66 = arith.constant 0 : index
    %107 = vector.load %arg17[%c0_64, %c0_65, %c0_66] : memref<1x12x2xf32, #tpu.memory_space<vmem>>, vector<1x12x2xf32>
    %108 = vector.shape_cast %107 : vector<1x12x2xf32> to vector<12x2xf32>
    %109 = vector.shape_cast %106 : vector<12x2xf32> to vector<1x12x2xf32>
    tpu.vector_store %arg17[%c0_64, %c0_65, %c0_66], %109 {strides = array<i32>} : memref<1x12x2xf32, #tpu.memory_space<vmem>>, vector<1x12x2xf32>,
    return
  }
  func.func @transform_0(%arg0: i32) -> (i32, i32) {
    %c0_i32 = arith.constant 0 : i32
    %c0_i32_0 = arith.constant 0 : i32
    %c0_i32_1 = arith.constant 0 : i32
    return %c0_i32, %c0_i32_0 : i32, i32
  }
  func.func @transform_1(%arg0: i32) -> (i32, i32) {
    %c0_i32 = arith.constant 0 : i32
    %c0_i32_0 = arith.constant 0 : i32
    %c0_i32_1 = arith.constant 0 : i32
    return %c0_i32, %c0_i32_0 : i32, i32
  }
  func.func @transform_2(%arg0: i32) -> (i32, i32, i32) {
    %c0_i32 = arith.constant 0 : i32
    %c0_i32_0 = arith.constant 0 : i32
    %c0_i32_1 = arith.constant 0 : i32
    return %arg0, %c0_i32, %c0_i32_0 : i32, i32, i32
  }
  func.func @transform_3(%arg0: i32) -> (i32, i32, i32) {
    %c0_i32 = arith.constant 0 : i32
    %c0_i32_0 = arith.constant 0 : i32
    %c0_i32_1 = arith.constant 0 : i32
    return %arg0, %c0_i32, %c0_i32_0 : i32, i32, i32
  }
  func.func @transform_4(%arg0: i32) -> (i32, i32, i32) {
    %c0_i32 = arith.constant 0 : i32
    %c0_i32_0 = arith.constant 0 : i32
    %c0_i32_1 = arith.constant 0 : i32
    return %arg0, %c0_i32, %c0_i32_0 : i32, i32, i32
  }
  func.func @transform_5(%arg0: i32) -> (i32, i32, i32) {
    %c0_i32 = arith.constant 0 : i32
    %c0_i32_0 = arith.constant 0 : i32
    %c0_i32_1 = arith.constant 0 : i32
    return %arg0, %c0_i32, %c0_i32_0 : i32, i32, i32
  }
  func.func @transform_6(%arg0: i32) -> (i32, i32, i32) {
    %c0_i32 = arith.constant 0 : i32
    %c0_i32_0 = arith.constant 0 : i32
    %c0_i32_1 = arith.constant 0 : i32
    return %arg0, %c0_i32, %c0_i32_0 : i32, i32, i32
  }
  func.func @transform_7(%arg0: i32) -> (i32, i32, i32) {
    %c0_i32 = arith.constant 0 : i32
    %c0_i32_0 = arith.constant 0 : i32
    %c0_i32_1 = arith.constant 0 : i32
    return %arg0, %c0_i32, %c0_i32_0 : i32, i32, i32
  }
  func.func @transform_8(%arg0: i32) -> (i32, i32, i32) {
    %c0_i32 = arith.constant 0 : i32
    %c0_i32_0 = arith.constant 0 : i32
    %c0_i32_1 = arith.constant 0 : i32
    return %arg0, %c0_i32, %c0_i32_0 : i32, i32, i32
  }
  func.func @transform_9(%arg0: i32) -> (i32, i32, i32) {
    %c0_i32 = arith.constant 0 : i32
    %c0_i32_0 = arith.constant 0 : i32
    %c0_i32_1 = arith.constant 0 : i32
    return %arg0, %c0_i32, %c0_i32_0 : i32, i32, i32
  }
  func.func @transform_10(%arg0: i32) -> (i32, i32, i32) {
    %c0_i32 = arith.constant 0 : i32
    %c0_i32_0 = arith.constant 0 : i32
    %c0_i32_1 = arith.constant 0 : i32
    return %arg0, %c0_i32, %c0_i32_0 : i32, i32, i32
  }
  func.func @transform_11(%arg0: i32) -> (i32, i32, i32) {
    %c0_i32 = arith.constant 0 : i32
    %c0_i32_0 = arith.constant 0 : i32
    %c0_i32_1 = arith.constant 0 : i32
    return %arg0, %c0_i32, %c0_i32_0 : i32, i32, i32
  }
  func.func @transform_12(%arg0: i32) -> (i32, i32, i32) {
    %c0_i32 = arith.constant 0 : i32
    %c0_i32_0 = arith.constant 0 : i32
    %c0_i32_1 = arith.constant 0 : i32
    return %arg0, %c0_i32, %c0_i32_0 : i32, i32, i32
  }
  func.func @transform_13(%arg0: i32) -> (i32, i32, i32) {
    %c0_i32 = arith.constant 0 : i32
    %c0_i32_0 = arith.constant 0 : i32
    %c0_i32_1 = arith.constant 0 : i32
    return %arg0, %c0_i32, %c0_i32_0 : i32, i32, i32
  }
  func.func @transform_14(%arg0: i32) -> (i32, i32, i32) {
    %c0_i32 = arith.constant 0 : i32
    %c0_i32_0 = arith.constant 0 : i32
    %c0_i32_1 = arith.constant 0 : i32
    return %arg0, %c0_i32, %c0_i32_0 : i32, i32, i32
  }
  func.func @transform_15(%arg0: i32) -> (i32, i32, i32) {
    %c0_i32 = arith.constant 0 : i32
    %c0_i32_0 = arith.constant 0 : i32
    %c0_i32_1 = arith.constant 0 : i32
    return %arg0, %c0_i32, %c0_i32_0 : i32, i32, i32
  }
  func.func @transform_16(%arg0: i32) -> (i32, i32, i32) {
    %c0_i32 = arith.constant 0 : i32
    %c0_i32_0 = arith.constant 0 : i32
    %c0_i32_1 = arith.constant 0 : i32
    return %arg0, %c0_i32, %c0_i32_0 : i32, i32, i32
  }
}

</mosaic_0001>

<llo_original>
// kernel: _lambda_.1
$region0: #{_lambda_.1}
  #allocation0 [shape = 'u32[]', space=smem, size = 0x4, offset = 0x4, fixed_abs, tag = 'smem constant byte address 0x4 - core index']
  #allocation1 [shape = 'u32[144,128]{1,0:T(1,128)}', space=vmem, size = 0x12000, scoped, tag = 'internal scratch']
  %s0 = inlined_call_operand.vmem [shape: s32[1,32], index: 0, kind: input, shape index: {}]
  %s1 = inlined_call_operand.vmem [shape: f32[32,2], index: 1, kind: input, shape index: {}]
  %s2 = inlined_call_operand.vmem [shape: f32[2,8,32], index: 2, kind: input, shape index: {}]
  %s3 = inlined_call_operand.vmem [shape: f32[2,32,16], index: 3, kind: input, shape index: {}]
  %s4 = inlined_call_operand.vmem [shape: f32[2,32,1], index: 4, kind: input, shape index: {}]
  %s5 = inlined_call_operand.vmem [shape: f32[2,16,32], index: 5, kind: input, shape index: {}]
  %s6 = inlined_call_operand.vmem [shape: f32[2,16,1], index: 6, kind: input, shape index: {}]
  %s7 = inlined_call_operand.vmem [shape: f32[2,64,32], index: 7, kind: input, shape index: {}]
  %s8 = inlined_call_operand.vmem [shape: f32[2,64,1], index: 8, kind: input, shape index: {}]
  %s9 = inlined_call_operand.vmem [shape: f32[2,32,64], index: 9, kind: input, shape index: {}]
  %s10 = inlined_call_operand.vmem [shape: f32[2,32,1], index: 10, kind: input, shape index: {}]
  %s11 = inlined_call_operand.vmem [shape: f32[2,128,64], index: 11, kind: input, shape index: {}]
  %s12 = inlined_call_operand.vmem [shape: f32[2,128,1], index: 12, kind: input, shape index: {}]
  %s13 = inlined_call_operand.vmem [shape: f32[2,64,128], index: 13, kind: input, shape index: {}]
  %s14 = inlined_call_operand.vmem [shape: f32[2,64,1], index: 14, kind: input, shape index: {}]
  %s15 = inlined_call_operand.vmem [shape: f32[2,12,64], index: 15, kind: input, shape index: {}]
  %s16 = inlined_call_operand.vmem [shape: f32[2,12,2], index: 16, kind: output, shape index: {}]
  %s17 = sld [smem:[#allocation0]]
  $region97: #{_lambda_.1} parent=0
    _
  %s19 = ssub.s32 1, %s17
  %s20 = scalar_select 0, %s19, %s17
  loop: start=0, step=1, limit=4
  $region2: #{_lambda_.1} parent=0 // loop_pre_header
    _
  $region3: #{_lambda_.1} parent=0 // loop_header
    %s22 = sphi 0, %s26
    %p23 = scmp.ge.s32.totalorder %s22, 4
    %s30 = sphi 0, %s30
    %s32 = sphi 0, %s30
    %s33 = sphi 0, %s32
    %s47 = sphi 0, %s33
    %s51 = sphi 0, %s51
    %s53 = sphi 0, %s51
    %s54 = sphi 0, %s53
    %s68 = sphi 0, %s54
    %s74 = sphi 0, %s76
    %s77 = sphi 0, %s74
    %s78 = sphi 0, %s77
    %s94 = sphi 0, %s78
    %s100 = sphi 0, %s102
    %s103 = sphi 0, %s100
    %s104 = sphi 0, %s103
    %s120 = sphi 0, %s104
    %s126 = sphi 0, %s128
    %s129 = sphi 0, %s126
    %s130 = sphi 0, %s129
    %s146 = sphi 0, %s130
    %s152 = sphi 0, %s154
    %s155 = sphi 0, %s152
    %s156 = sphi 0, %s155
    %s172 = sphi 0, %s156
    %s178 = sphi 0, %s180
    %s181 = sphi 0, %s178
    %s182 = sphi 0, %s181
    %s198 = sphi 0, %s182
    %s204 = sphi 0, %s206
    %s207 = sphi 0, %s204
    %s208 = sphi 0, %s207
    %s224 = sphi 0, %s208
    %s230 = sphi 0, %s232
    %s233 = sphi 0, %s230
    %s234 = sphi 0, %s233
    %s250 = sphi 0, %s234
    %s256 = sphi 0, %s258
    %s259 = sphi 0, %s256
    %s260 = sphi 0, %s259
    %s276 = sphi 0, %s260
    %s282 = sphi 0, %s284
    %s285 = sphi 0, %s282
    %s286 = sphi 0, %s285
    %s302 = sphi 0, %s286
    %s308 = sphi 0, %s310
    %s311 = sphi 0, %s308
    %s312 = sphi 0, %s311
    %s328 = sphi 0, %s312
    %s334 = sphi 0, %s336
    %s337 = sphi 0, %s334
    %s338 = sphi 0, %s337
    %s354 = sphi 0, %s338
    %s360 = sphi 0, %s362
    %s363 = sphi 0, %s360
    %s364 = sphi 0, %s363
    %s380 = sphi 0, %s364
    %s386 = sphi 0, %s388
    %s389 = sphi 0, %s386
    %s390 = sphi 0, %s389
    %s406 = sphi 0, %s390
    %s412 = sphi 0, %s414
    %s415 = sphi 0, %s412
    %s416 = sphi 0, %s415
    %s432 = sphi 0, %s416
    %s438 = sphi 0, %s440
    %s441 = sphi 0, %s438
    %s442 = sphi 0, %s441
    %s458 = sphi 0, %s442
  $region4: #{_lambda_.1} parent=0 // loop_header_branch
    %25 = sbr.rel (%p23) target = $region8
  $region5: #{_lambda_.1} parent=0 // loop_body
    %s27 = ssub.s32 %s22, 1
    %s28 = ssub.s32 %s22, 2
    %s29 = sadd.s32 %s22, 1
    %s31 = sadd.s32 %s30, 1
    %p34 = scmp.eq.s32.totalorder %s22, 1
    %p35 = scmp.ne.s32.totalorder %s30, %s32
    %p36 = scmp.eq.s32.totalorder %s22, 0
    %p37 = por %p35, %p36
    %p38 = scmp.ne.s32.totalorder %s30, %s32
    %p39 = scmp.eq.s32.totalorder %s27, 1
    %p40 = por %p38, %p39
    %p41 = scmp.ne.s32.totalorder %s32, %s33
    %p42 = scmp.eq.s32.totalorder %s27, 0
    %p43 = por %p41, %p42
    %p44 = scmp.ne.s32.totalorder %s32, %s33
    %p45 = scmp.eq.s32.totalorder %s28, 1
    %p46 = por %p44, %p45
    %p48 = scmp.ne.s32.totalorder %s33, %s47
    %p49 = scmp.eq.s32.totalorder %s28, 0
    %p50 = por %p48, %p49
    %s52 = sadd.s32 %s51, 1
    %p55 = scmp.eq.s32.totalorder %s22, 1
    %p56 = scmp.ne.s32.totalorder %s51, %s53
    %p57 = scmp.eq.s32.totalorder %s22, 0
    %p58 = por %p56, %p57
    %p59 = scmp.ne.s32.totalorder %s51, %s53
    %p60 = scmp.eq.s32.totalorder %s27, 1
    %p61 = por %p59, %p60
    %p62 = scmp.ne.s32.totalorder %s53, %s54
    %p63 = scmp.eq.s32.totalorder %s27, 0
    %p64 = por %p62, %p63
    %p65 = scmp.ne.s32.totalorder %s53, %s54
    %p66 = scmp.eq.s32.totalorder %s28, 1
    %p67 = por %p65, %p66
    %p69 = scmp.ne.s32.totalorder %s54, %s68
    %p70 = scmp.eq.s32.totalorder %s28, 0
    %p71 = por %p69, %p70
    %s72 = ssub.s32 %s22, %s29
    %p73 = scmp.eq.s32.totalorder %s72, 0
    %s75 = sadd.s32 %s74, 1
    %s76 = scalar_select %p73, %s74, %s75
    %p79 = pneg %p73
    %p80 = scmp.eq.s32.totalorder %s22, 1
    %p81 = por %p79, %p80
    %p82 = scmp.ne.s32.totalorder %s74, %s77
    %p83 = scmp.eq.s32.totalorder %s22, 0
    %p84 = por %p82, %p83
    %p85 = scmp.ne.s32.totalorder %s74, %s77
    %p86 = scmp.eq.s32.totalorder %s27, 1
    %p87 = por %p85, %p86
    %p88 = scmp.ne.s32.totalorder %s77, %s78
    %p89 = scmp.eq.s32.totalorder %s27, 0
    %p90 = por %p88, %p89
    %p91 = scmp.ne.s32.totalorder %s77, %s78
    %p92 = scmp.eq.s32.totalorder %s28, 1
    %p93 = por %p91, %p92
    %p95 = scmp.ne.s32.totalorder %s78, %s94
    %p96 = scmp.eq.s32.totalorder %s28, 0
    %p97 = por %p95, %p96
    %s98 = ssub.s32 %s22, %s29
    %p99 = scmp.eq.s32.totalorder %s98, 0
    %s101 = sadd.s32 %s100, 1
    %s102 = scalar_select %p99, %s100, %s101
    %p105 = pneg %p99
    %p106 = scmp.eq.s32.totalorder %s22, 1
    %p107 = por %p105, %p106
    %p108 = scmp.ne.s32.totalorder %s100, %s103
    %p109 = scmp.eq.s32.totalorder %s22, 0
    %p110 = por %p108, %p109
    %p111 = scmp.ne.s32.totalorder %s100, %s103
    %p112 = scmp.eq.s32.totalorder %s27, 1
    %p113 = por %p111, %p112
    %p114 = scmp.ne.s32.totalorder %s103, %s104
    %p115 = scmp.eq.s32.totalorder %s27, 0
    %p116 = por %p114, %p115
    %p117 = scmp.ne.s32.totalorder %s103, %s104
    %p118 = scmp.eq.s32.totalorder %s28, 1
    %p119 = por %p117, %p118
    %p121 = scmp.ne.s32.totalorder %s104, %s120
    %p122 = scmp.eq.s32.totalorder %s28, 0
    %p123 = por %p121, %p122
    %s124 = ssub.s32 %s22, %s29
    %p125 = scmp.eq.s32.totalorder %s124, 0
    %s127 = sadd.s32 %s126, 1
    %s128 = scalar_select %p125, %s126, %s127
    %p131 = pneg %p125
    %p132 = scmp.eq.s32.totalorder %s22, 1
    %p133 = por %p131, %p132
    %p134 = scmp.ne.s32.totalorder %s126, %s129
    %p135 = scmp.eq.s32.totalorder %s22, 0
    %p136 = por %p134, %p135
    %p137 = scmp.ne.s32.totalorder %s126, %s129
    %p138 = scmp.eq.s32.totalorder %s27, 1
    %p139 = por %p137, %p138
    %p140 = scmp.ne.s32.totalorder %s129, %s130
    %p141 = scmp.eq.s32.totalorder %s27, 0
    %p142 = por %p140, %p141
    %p143 = scmp.ne.s32.totalorder %s129, %s130
    %p144 = scmp.eq.s32.totalorder %s28, 1
    %p145 = por %p143, %p144
    %p147 = scmp.ne.s32.totalorder %s130, %s146
    %p148 = scmp.eq.s32.totalorder %s28, 0
    %p149 = por %p147, %p148
    %s150 = ssub.s32 %s22, %s29
    %p151 = scmp.eq.s32.totalorder %s150, 0
    %s153 = sadd.s32 %s152, 1
    %s154 = scalar_select %p151, %s152, %s153
    %p157 = pneg %p151
    %p158 = scmp.eq.s32.totalorder %s22, 1
    %p159 = por %p157, %p158
    %p160 = scmp.ne.s32.totalorder %s152, %s155
    %p161 = scmp.eq.s32.totalorder %s22, 0
    %p162 = por %p160, %p161
    %p163 = scmp.ne.s32.totalorder %s152, %s155
    %p164 = scmp.eq.s32.totalorder %s27, 1
    %p165 = por %p163, %p164
    %p166 = scmp.ne.s32.totalorder %s155, %s156
    %p167 = scmp.eq.s32.totalorder %s27, 0
    %p168 = por %p166, %p167
    %p169 = scmp.ne.s32.totalorder %s155, %s156
    %p170 = scmp.eq.s32.totalorder %s28, 1
    %p171 = por %p169, %p170
    %p173 = scmp.ne.s32.totalorder %s156, %s172
    %p174 = scmp.eq.s32.totalorder %s28, 0
    %p175 = por %p173, %p174
    %s176 = ssub.s32 %s22, %s29
    %p177 = scmp.eq.s32.totalorder %s176, 0
    %s179 = sadd.s32 %s178, 1
    %s180 = scalar_select %p177, %s178, %s179
    %p183 = pneg %p177
    %p184 = scmp.eq.s32.totalorder %s22, 1
    %p185 = por %p183, %p184
    %p186 = scmp.ne.s32.totalorder %s178, %s181
    %p187 = scmp.eq.s32.totalorder %s22, 0
    %p188 = por %p186, %p187
    %p189 = scmp.ne.s32.totalorder %s178, %s181
    %p190 = scmp.eq.s32.totalorder %s27, 1
    %p191 = por %p189, %p190
    %p192 = scmp.ne.s32.totalorder %s181, %s182
    %p193 = scmp.eq.s32.totalorder %s27, 0
    %p194 = por %p192, %p193
    %p195 = scmp.ne.s32.totalorder %s181, %s182
    %p196 = scmp.eq.s32.totalorder %s28, 1
    %p197 = por %p195, %p196
    %p199 = scmp.ne.s32.totalorder %s182, %s198
    %p200 = scmp.eq.s32.totalorder %s28, 0
    %p201 = por %p199, %p200
    %s202 = ssub.s32 %s22, %s29
    %p203 = scmp.eq.s32.totalorder %s202, 0
    %s205 = sadd.s32 %s204, 1
    %s206 = scalar_select %p203, %s204, %s205
    %p209 = pneg %p203
    %p210 = scmp.eq.s32.totalorder %s22, 1
    %p211 = por %p209, %p210
    %p212 = scmp.ne.s32.totalorder %s204, %s207
    %p213 = scmp.eq.s32.totalorder %s22, 0
    %p214 = por %p212, %p213
    %p215 = scmp.ne.s32.totalorder %s204, %s207
    %p216 = scmp.eq.s32.totalorder %s27, 1
    %p217 = por %p215, %p216
    %p218 = scmp.ne.s32.totalorder %s207, %s208
    %p219 = scmp.eq.s32.totalorder %s27, 0
    %p220 = por %p218, %p219
    %p221 = scmp.ne.s32.totalorder %s207, %s208
    %p222 = scmp.eq.s32.totalorder %s28, 1
    %p223 = por %p221, %p222
    %p225 = scmp.ne.s32.totalorder %s208, %s224
    %p226 = scmp.eq.s32.totalorder %s28, 0
    %p227 = por %p225, %p226
    %s228 = ssub.s32 %s22, %s29
    %p229 = scmp.eq.s32.totalorder %s228, 0
    %s231 = sadd.s32 %s230, 1
    %s232 = scalar_select %p229, %s230, %s231
    %p235 = pneg %p229
    %p236 = scmp.eq.s32.totalorder %s22, 1
    %p237 = por %p235, %p236
    %p238 = scmp.ne.s32.totalorder %s230, %s233
    %p239 = scmp.eq.s32.totalorder %s22, 0
    %p240 = por %p238, %p239
    %p241 = scmp.ne.s32.totalorder %s230, %s233
    %p242 = scmp.eq.s32.totalorder %s27, 1
    %p243 = por %p241, %p242
    %p244 = scmp.ne.s32.totalorder %s233, %s234
    %p245 = scmp.eq.s32.totalorder %s27, 0
    %p246 = por %p244, %p245
    %p247 = scmp.ne.s32.totalorder %s233, %s234
    %p248 = scmp.eq.s32.totalorder %s28, 1
    %p249 = por %p247, %p248
    %p251 = scmp.ne.s32.totalorder %s234, %s250
    %p252 = scmp.eq.s32.totalorder %s28, 0
    %p253 = por %p251, %p252
    %s254 = ssub.s32 %s22, %s29
    %p255 = scmp.eq.s32.totalorder %s254, 0
    %s257 = sadd.s32 %s256, 1
    %s258 = scalar_select %p255, %s256, %s257
    %p261 = pneg %p255
    %p262 = scmp.eq.s32.totalorder %s22, 1
    %p263 = por %p261, %p262
    %p264 = scmp.ne.s32.totalorder %s256, %s259
    %p265 = scmp.eq.s32.totalorder %s22, 0
    %p266 = por %p264, %p265
    %p267 = scmp.ne.s32.totalorder %s256, %s259
    %p268 = scmp.eq.s32.totalorder %s27, 1
    %p269 = por %p267, %p268
    %p270 = scmp.ne.s32.totalorder %s259, %s260
    %p271 = scmp.eq.s32.totalorder %s27, 0
    %p272 = por %p270, %p271
    %p273 = scmp.ne.s32.totalorder %s259, %s260
    %p274 = scmp.eq.s32.totalorder %s28, 1
    %p275 = por %p273, %p274
    %p277 = scmp.ne.s32.totalorder %s260, %s276
    %p278 = scmp.eq.s32.totalorder %s28, 0
    %p279 = por %p277, %p278
    %s280 = ssub.s32 %s22, %s29
    %p281 = scmp.eq.s32.totalorder %s280, 0
    %s283 = sadd.s32 %s282, 1
    %s284 = scalar_select %p281, %s282, %s283
    %p287 = pneg %p281
    %p288 = scmp.eq.s32.totalorder %s22, 1
    %p289 = por %p287, %p288
    %p290 = scmp.ne.s32.totalorder %s282, %s285
    %p291 = scmp.eq.s32.totalorder %s22, 0
    %p292 = por %p290, %p291
    %p293 = scmp.ne.s32.totalorder %s282, %s285
    %p294 = scmp.eq.s32.totalorder %s27, 1
    %p295 = por %p293, %p294
    %p296 = scmp.ne.s32.totalorder %s285, %s286
    %p297 = scmp.eq.s32.totalorder %s27, 0
    %p298 = por %p296, %p297
    %p299 = scmp.ne.s32.totalorder %s285, %s286
    %p300 = scmp.eq.s32.totalorder %s28, 1
    %p301 = por %p299, %p300
    %p303 = scmp.ne.s32.totalorder %s286, %s302
    %p304 = scmp.eq.s32.totalorder %s28, 0
    %p305 = por %p303, %p304
    %s306 = ssub.s32 %s22, %s29
    %p307 = scmp.eq.s32.totalorder %s306, 0
    %s309 = sadd.s32 %s308, 1
    %s310 = scalar_select %p307, %s308, %s309
    %p313 = pneg %p307
    %p314 = scmp.eq.s32.totalorder %s22, 1
    %p315 = por %p313, %p314
    %p316 = scmp.ne.s32.totalorder %s308, %s311
    %p317 = scmp.eq.s32.totalorder %s22, 0
    %p318 = por %p316, %p317
    %p319 = scmp.ne.s32.totalorder %s308, %s311
    %p320 = scmp.eq.s32.totalorder %s27, 1
    %p321 = por %p319, %p320
    %p322 = scmp.ne.s32.totalorder %s311, %s312
    %p323 = scmp.eq.s32.totalorder %s27, 0
    %p324 = por %p322, %p323
    %p325 = scmp.ne.s32.totalorder %s311, %s312
    %p326 = scmp.eq.s32.totalorder %s28, 1
    %p327 = por %p325, %p326
    %p329 = scmp.ne.s32.totalorder %s312, %s328
    %p330 = scmp.eq.s32.totalorder %s28, 0
    %p331 = por %p329, %p330
    %s332 = ssub.s32 %s22, %s29
    %p333 = scmp.eq.s32.totalorder %s332, 0
    %s335 = sadd.s32 %s334, 1
    %s336 = scalar_select %p333, %s334, %s335
    %p339 = pneg %p333
    %p340 = scmp.eq.s32.totalorder %s22, 1
    %p341 = por %p339, %p340
    %p342 = scmp.ne.s32.totalorder %s334, %s337
    %p343 = scmp.eq.s32.totalorder %s22, 0
    %p344 = por %p342, %p343
    %p345 = scmp.ne.s32.totalorder %s334, %s337
    %p346 = scmp.eq.s32.totalorder %s27, 1
    %p347 = por %p345, %p346
    %p348 = scmp.ne.s32.totalorder %s337, %s338
    %p349 = scmp.eq.s32.totalorder %s27, 0
    %p350 = por %p348, %p349
    %p351 = scmp.ne.s32.totalorder %s337, %s338
    %p352 = scmp.eq.s32.totalorder %s28, 1
    %p353 = por %p351, %p352
    %p355 = scmp.ne.s32.totalorder %s338, %s354
    %p356 = scmp.eq.s32.totalorder %s28, 0
    %p357 = por %p355, %p356
    %s358 = ssub.s32 %s22, %s29
    %p359 = scmp.eq.s32.totalorder %s358, 0
    %s361 = sadd.s32 %s360, 1
    %s362 = scalar_select %p359, %s360, %s361
    %p365 = pneg %p359
    %p366 = scmp.eq.s32.totalorder %s22, 1
    %p367 = por %p365, %p366
    %p368 = scmp.ne.s32.totalorder %s360, %s363
    %p369 = scmp.eq.s32.totalorder %s22, 0
    %p370 = por %p368, %p369
    %p371 = scmp.ne.s32.totalorder %s360, %s363
    %p372 = scmp.eq.s32.totalorder %s27, 1
    %p373 = por %p371, %p372
    %p374 = scmp.ne.s32.totalorder %s363, %s364
    %p375 = scmp.eq.s32.totalorder %s27, 0
    %p376 = por %p374, %p375
    %p377 = scmp.ne.s32.totalorder %s363, %s364
    %p378 = scmp.eq.s32.totalorder %s28, 1
    %p379 = por %p377, %p378
    %p381 = scmp.ne.s32.totalorder %s364, %s380
    %p382 = scmp.eq.s32.totalorder %s28, 0
    %p383 = por %p381, %p382
    %s384 = ssub.s32 %s22, %s29
    %p385 = scmp.eq.s32.totalorder %s384, 0
    %s387 = sadd.s32 %s386, 1
    %s388 = scalar_select %p385, %s386, %s387
    %p391 = pneg %p385
    %p392 = scmp.eq.s32.totalorder %s22, 1
    %p393 = por %p391, %p392
    %p394 = scmp.ne.s32.totalorder %s386, %s389
    %p395 = scmp.eq.s32.totalorder %s22, 0
    %p396 = por %p394, %p395
    %p397 = scmp.ne.s32.totalorder %s386, %s389
    %p398 = scmp.eq.s32.totalorder %s27, 1
    %p399 = por %p397, %p398
    %p400 = scmp.ne.s32.totalorder %s389, %s390
    %p401 = scmp.eq.s32.totalorder %s27, 0
    %p402 = por %p400, %p401
    %p403 = scmp.ne.s32.totalorder %s389, %s390
    %p404 = scmp.eq.s32.totalorder %s28, 1
    %p405 = por %p403, %p404
    %p407 = scmp.ne.s32.totalorder %s390, %s406
    %p408 = scmp.eq.s32.totalorder %s28, 0
    %p409 = por %p407, %p408
    %s410 = ssub.s32 %s22, %s29
    %p411 = scmp.eq.s32.totalorder %s410, 0
    %s413 = sadd.s32 %s412, 1
    %s414 = scalar_select %p411, %s412, %s413
    %p417 = pneg %p411
    %p418 = scmp.eq.s32.totalorder %s22, 1
    %p419 = por %p417, %p418
    %p420 = scmp.ne.s32.totalorder %s412, %s415
    %p421 = scmp.eq.s32.totalorder %s22, 0
    %p422 = por %p420, %p421
    %p423 = scmp.ne.s32.totalorder %s412, %s415
    %p424 = scmp.eq.s32.totalorder %s27, 1
    %p425 = por %p423, %p424
    %p426 = scmp.ne.s32.totalorder %s415, %s416
    %p427 = scmp.eq.s32.totalorder %s27, 0
    %p428 = por %p426, %p427
    %p429 = scmp.ne.s32.totalorder %s415, %s416
    %p430 = scmp.eq.s32.totalorder %s28, 1
    %p431 = por %p429, %p430
    %p433 = scmp.ne.s32.totalorder %s416, %s432
    %p434 = scmp.eq.s32.totalorder %s28, 0
    %p435 = por %p433, %p434
    %s436 = ssub.s32 %s22, %s29
    %p437 = scmp.eq.s32.totalorder %s436, 0
    %s439 = sadd.s32 %s438, 1
    %s440 = scalar_select %p437, %s438, %s439
    %p443 = pneg %p437
    %p444 = scmp.eq.s32.totalorder %s22, 1
    %p445 = por %p443, %p444
    %p446 = scmp.ne.s32.totalorder %s438, %s441
    %p447 = scmp.eq.s32.totalorder %s22, 0
    %p448 = por %p446, %p447
    %p449 = scmp.ne.s32.totalorder %s438, %s441
    %p450 = scmp.eq.s32.totalorder %s27, 1
    %p451 = por %p449, %p450
    %p452 = scmp.ne.s32.totalorder %s441, %s442
    %p453 = scmp.eq.s32.totalorder %s27, 0
    %p454 = por %p452, %p453
    %p455 = scmp.ne.s32.totalorder %s441, %s442
    %p456 = scmp.eq.s32.totalorder %s28, 1
    %p457 = por %p455, %p456
    %p459 = scmp.ne.s32.totalorder %s442, %s458
    %p460 = scmp.eq.s32.totalorder %s28, 0
    %p461 = por %p459, %p460
    %p462 = scmp.le.s32.totalorder 1, %s22
    %p463 = scmp.lt.s32.totalorder %s22, 3
    %p464 = pnand %p462, %p463
    %p465 = pneg %p464
    // Predicated region
    $region9: #{_lambda_.1} parent=5 // pred_check
      _
    $region10: #{_lambda_.1} parent=5 // pred_check_branch
      %467 = sbr.rel (%p464) target = $region12
    $region11: #{_lambda_.1} parent=5 // pred_region
      %s468 = ssub.s32 %s22, 1
      // Predicated region
      $region13: #{_lambda_.1} parent=11 // pred_check
        %p469 = pneg %p43
      $region14: #{_lambda_.1} parent=11 // pred_check_branch
        %471 = sbr.rel (%p469) target = $region16
      $region15: #{_lambda_.1} parent=11 // pred_region
        _
      $region16: #{_lambda_.1} parent=11 // pred_fallthru
        _
      // Predicated region
      $region17: #{_lambda_.1} parent=11 // pred_check
        %p472 = pneg %p64
      $region18: #{_lambda_.1} parent=11 // pred_check_branch
        %474 = sbr.rel (%p472) target = $region20
      $region19: #{_lambda_.1} parent=11 // pred_region
        _
      $region20: #{_lambda_.1} parent=11 // pred_fallthru
        _
    $region12: #{_lambda_.1} parent=5 // pred_fallthru
      _
    %p475 = scmp.lt.s32.totalorder %s22, 2
    // Predicated region
    $region21: #{_lambda_.1} parent=5 // pred_check
      %p476 = pneg %p475
    $region22: #{_lambda_.1} parent=5 // pred_check_branch
      %478 = sbr.rel (%p476) target = $region24
    $region23: #{_lambda_.1} parent=5 // pred_region
      // Predicated region
      $region25: #{_lambda_.1} parent=23 // pred_check
        %p479 = pneg %p84
      $region26: #{_lambda_.1} parent=23 // pred_check_branch
        %481 = sbr.rel (%p479) target = $region28
      $region27: #{_lambda_.1} parent=23 // pred_region
        %p482 = scmp.lt.s32.totalorder %s22, 1
        %s483 = scalar_select %p482, %s22, 1
        %s484 = smul.addr %s483, 8
        %s485 = scalar_lea.vmem %s2, %s484
      $region28: #{_lambda_.1} parent=23 // pred_fallthru
        _
      // Predicated region
      $region29: #{_lambda_.1} parent=23 // pred_check
        %p486 = pneg %p110
      $region30: #{_lambda_.1} parent=23 // pred_check_branch
        %488 = sbr.rel (%p486) target = $region32
      $region31: #{_lambda_.1} parent=23 // pred_region
        %p489 = scmp.lt.s32.totalorder %s22, 1
        %s490 = scalar_select %p489, %s22, 1
        %s491 = smul.addr %s490, 4
        %s492 = smul.addr %s491, 8
        %s493 = scalar_lea.vmem %s3, %s492
      $region32: #{_lambda_.1} parent=23 // pred_fallthru
        _
      // Predicated region
      $region33: #{_lambda_.1} parent=23 // pred_check
        %p494 = pneg %p136
      $region34: #{_lambda_.1} parent=23 // pred_check_branch
        %496 = sbr.rel (%p494) target = $region36
      $region35: #{_lambda_.1} parent=23 // pred_region
        %p497 = scmp.lt.s32.totalorder %s22, 1
        %s498 = scalar_select %p497, %s22, 1
        %s499 = smul.addr %s498, 4
        %s500 = smul.addr %s499, 8
        %s501 = scalar_lea.vmem %s4, %s500
      $region36: #{_lambda_.1} parent=23 // pred_fallthru
        _
      // Predicated region
      $region37: #{_lambda_.1} parent=23 // pred_check
        %p502 = pneg %p162
      $region38: #{_lambda_.1} parent=23 // pred_check_branch
        %504 = sbr.rel (%p502) target = $region40
      $region39: #{_lambda_.1} parent=23 // pred_region
        %p505 = scmp.lt.s32.totalorder %s22, 1
        %s506 = scalar_select %p505, %s22, 1
        %s507 = smul.addr %s506, 2
        %s508 = smul.addr %s507, 8
        %s509 = scalar_lea.vmem %s5, %s508
      $region40: #{_lambda_.1} parent=23 // pred_fallthru
        _
      // Predicated region
      $region41: #{_lambda_.1} parent=23 // pred_check
        %p510 = pneg %p188
      $region42: #{_lambda_.1} parent=23 // pred_check_branch
        %512 = sbr.rel (%p510) target = $region44
      $region43: #{_lambda_.1} parent=23 // pred_region
        %p513 = scmp.lt.s32.totalorder %s22, 1
        %s514 = scalar_select %p513, %s22, 1
        %s515 = smul.addr %s514, 2
        %s516 = smul.addr %s515, 8
        %s517 = scalar_lea.vmem %s6, %s516
      $region44: #{_lambda_.1} parent=23 // pred_fallthru
        _
      // Predicated region
      $region45: #{_lambda_.1} parent=23 // pred_check
        %p518 = pneg %p214
      $region46: #{_lambda_.1} parent=23 // pred_check_branch
        %520 = sbr.rel (%p518) target = $region48
      $region47: #{_lambda_.1} parent=23 // pred_region
        %p521 = scmp.lt.s32.totalorder %s22, 1
        %s522 = scalar_select %p521, %s22, 1
        %s523 = smul.addr %s522, 8
        %s524 = smul.addr %s523, 8
        %s525 = scalar_lea.vmem %s7, %s524
      $region48: #{_lambda_.1} parent=23 // pred_fallthru
        _
      // Predicated region
      $region49: #{_lambda_.1} parent=23 // pred_check
        %p526 = pneg %p240
      $region50: #{_lambda_.1} parent=23 // pred_check_branch
        %528 = sbr.rel (%p526) target = $region52
      $region51: #{_lambda_.1} parent=23 // pred_region
        %p529 = scmp.lt.s32.totalorder %s22, 1
        %s530 = scalar_select %p529, %s22, 1
        %s531 = smul.addr %s530, 8
        %s532 = smul.addr %s531, 8
        %s533 = scalar_lea.vmem %s8, %s532
      $region52: #{_lambda_.1} parent=23 // pred_fallthru
        _
      // Predicated region
      $region53: #{_lambda_.1} parent=23 // pred_check
        %p534 = pneg %p266
      $region54: #{_lambda_.1} parent=23 // pred_check_branch
        %536 = sbr.rel (%p534) target = $region56
      $region55: #{_lambda_.1} parent=23 // pred_region
        %p537 = scmp.lt.s32.totalorder %s22, 1
        %s538 = scalar_select %p537, %s22, 1
        %s539 = smul.addr %s538, 4
        %s540 = smul.addr %s539, 8
        %s541 = scalar_lea.vmem %s9, %s540
      $region56: #{_lambda_.1} parent=23 // pred_fallthru
        _
      // Predicated region
      $region57: #{_lambda_.1} parent=23 // pred_check
        %p542 = pneg %p292
      $region58: #{_lambda_.1} parent=23 // pred_check_branch
        %544 = sbr.rel (%p542) target = $region60
      $region59: #{_lambda_.1} parent=23 // pred_region
        %p545 = scmp.lt.s32.totalorder %s22, 1
        %s546 = scalar_select %p545, %s22, 1
        %s547 = smul.addr %s546, 4
        %s548 = smul.addr %s547, 8
        %s549 = scalar_lea.vmem %s10, %s548
      $region60: #{_lambda_.1} parent=23 // pred_fallthru
        _
      // Predicated region
      $region61: #{_lambda_.1} parent=23 // pred_check
        %p550 = pneg %p318
      $region62: #{_lambda_.1} parent=23 // pred_check_branch
        %552 = sbr.rel (%p550) target = $region64
      $region63: #{_lambda_.1} parent=23 // pred_region
        %p553 = scmp.lt.s32.totalorder %s22, 1
        %s554 = scalar_select %p553, %s22, 1
        %s555 = smul.addr %s554, 16
        %s556 = smul.addr %s555, 8
        %s557 = scalar_lea.vmem %s11, %s556
      $region64: #{_lambda_.1} parent=23 // pred_fallthru
        _
      // Predicated region
      $region65: #{_lambda_.1} parent=23 // pred_check
        %p558 = pneg %p344
      $region66: #{_lambda_.1} parent=23 // pred_check_branch
        %560 = sbr.rel (%p558) target = $region68
      $region67: #{_lambda_.1} parent=23 // pred_region
        %p561 = scmp.lt.s32.totalorder %s22, 1
        %s562 = scalar_select %p561, %s22, 1
        %s563 = smul.addr %s562, 16
        %s564 = smul.addr %s563, 8
        %s565 = scalar_lea.vmem %s12, %s564
      $region68: #{_lambda_.1} parent=23 // pred_fallthru
        _
      // Predicated region
      $region69: #{_lambda_.1} parent=23 // pred_check
        %p566 = pneg %p370
      $region70: #{_lambda_.1} parent=23 // pred_check_branch
        %568 = sbr.rel (%p566) target = $region72
      $region71: #{_lambda_.1} parent=23 // pred_region
        %p569 = scmp.lt.s32.totalorder %s22, 1
        %s570 = scalar_select %p569, %s22, 1
        %s571 = smul.addr %s570, 8
        %s572 = smul.addr %s571, 8
        %s573 = scalar_lea.vmem %s13, %s572
      $region72: #{_lambda_.1} parent=23 // pred_fallthru
        _
      // Predicated region
      $region73: #{_lambda_.1} parent=23 // pred_check
        %p574 = pneg %p396
      $region74: #{_lambda_.1} parent=23 // pred_check_branch
        %576 = sbr.rel (%p574) target = $region76
      $region75: #{_lambda_.1} parent=23 // pred_region
        %p577 = scmp.lt.s32.totalorder %s22, 1
        %s578 = scalar_select %p577, %s22, 1
        %s579 = smul.addr %s578, 8
        %s580 = smul.addr %s579, 8
        %s581 = scalar_lea.vmem %s14, %s580
      $region76: #{_lambda_.1} parent=23 // pred_fallthru
        _
      // Predicated region
      $region77: #{_lambda_.1} parent=23 // pred_check
        %p582 = pneg %p422
      $region78: #{_lambda_.1} parent=23 // pred_check_branch
        %584 = sbr.rel (%p582) target = $region80
      $region79: #{_lambda_.1} parent=23 // pred_region
        %p585 = scmp.lt.s32.totalorder %s22, 1
        %s586 = scalar_select %p585, %s22, 1
        %s587 = smul.addr %s586, 2
        %s588 = smul.addr %s587, 8
        %s589 = scalar_lea.vmem %s15, %s588
      $region80: #{_lambda_.1} parent=23 // pred_fallthru
        _
    $region24: #{_lambda_.1} parent=5 // pred_fallthru
      _
    %p590 = scmp.le.s32.totalorder 1, %s22
    %p591 = scmp.lt.s32.totalorder %s22, 3
    %p592 = pnand %p590, %p591
    %p593 = pneg %p592
    // Predicated region
    $region81: #{_lambda_.1} parent=5 // pred_check
      _
    $region82: #{_lambda_.1} parent=5 // pred_check_branch
      %595 = sbr.rel (%p592) target = $region84
    $region83: #{_lambda_.1} parent=5 // pred_region
      %s596 = ssub.s32 %s22, 1
      %p597 = pneg %p43
      %p598 = pneg %p40
      %p599 = pneg %p64
      %p600 = pneg %p61
      %p601 = scmp.lt.s32.totalorder %s27, 1
      %s602 = scalar_select %p601, %s27, 1
      %s603 = smul.addr %s602, 8
      %s604 = scalar_lea.vmem %s2, %s603
      %p605 = pneg %p90
      %p606 = pneg %p87
      %p607 = scmp.lt.s32.totalorder %s27, 1
      %s608 = scalar_select %p607, %s27, 1
      %s609 = smul.addr %s608, 4
      %s610 = smul.addr %s609, 8
      %s611 = scalar_lea.vmem %s3, %s610
      %p612 = pneg %p116
      %p613 = pneg %p113
      %p614 = scmp.lt.s32.totalorder %s27, 1
      %s615 = scalar_select %p614, %s27, 1
      %s616 = smul.addr %s615, 4
      %s617 = smul.addr %s616, 8
      %s618 = scalar_lea.vmem %s4, %s617
      %p619 = pneg %p142
      %p620 = pneg %p139
      %p621 = scmp.lt.s32.totalorder %s27, 1
      %s622 = scalar_select %p621, %s27, 1
      %s623 = smul.addr %s622, 2
      %s624 = smul.addr %s623, 8
      %s625 = scalar_lea.vmem %s5, %s624
      %p626 = pneg %p168
      %p627 = pneg %p165
      %p628 = scmp.lt.s32.totalorder %s27, 1
      %s629 = scalar_select %p628, %s27, 1
      %s630 = smul.addr %s629, 2
      %s631 = smul.addr %s630, 8
      %s632 = scalar_lea.vmem %s6, %s631
      %p633 = pneg %p194
      %p634 = pneg %p191
      %p635 = scmp.lt.s32.totalorder %s27, 1
      %s636 = scalar_select %p635, %s27, 1
      %s637 = smul.addr %s636, 8
      %s638 = smul.addr %s637, 8
      %s639 = scalar_lea.vmem %s7, %s638
      %p640 = pneg %p220
      %p641 = pneg %p217
      %p642 = scmp.lt.s32.totalorder %s27, 1
      %s643 = scalar_select %p642, %s27, 1
      %s644 = smul.addr %s643, 8
      %s645 = smul.addr %s644, 8
      %s646 = scalar_lea.vmem %s8, %s645
      %p647 = pneg %p246
      %p648 = pneg %p243
      %p649 = scmp.lt.s32.totalorder %s27, 1
      %s650 = scalar_select %p649, %s27, 1
      %s651 = smul.addr %s650, 4
      %s652 = smul.addr %s651, 8
      %s653 = scalar_lea.vmem %s9, %s652
      %p654 = pneg %p272
      %p655 = pneg %p269
      %p656 = scmp.lt.s32.totalorder %s27, 1
      %s657 = scalar_select %p656, %s27, 1
      %s658 = smul.addr %s657, 4
      %s659 = smul.addr %s658, 8
      %s660 = scalar_lea.vmem %s10, %s659
      %p661 = pneg %p298
      %p662 = pneg %p295
      %p663 = scmp.lt.s32.totalorder %s27, 1
      %s664 = scalar_select %p663, %s27, 1
      %s665 = smul.addr %s664, 16
      %s666 = smul.addr %s665, 8
      %s667 = scalar_lea.vmem %s11, %s666
      %p668 = pneg %p324
      %p669 = pneg %p321
      %p670 = scmp.lt.s32.totalorder %s27, 1
      %s671 = scalar_select %p670, %s27, 1
      %s672 = smul.addr %s671, 16
      %s673 = smul.addr %s672, 8
      %s674 = scalar_lea.vmem %s12, %s673
      %p675 = pneg %p350
      %p676 = pneg %p347
      %p677 = scmp.lt.s32.totalorder %s27, 1
      %s678 = scalar_select %p677, %s27, 1
      %s679 = smul.addr %s678, 8
      %s680 = smul.addr %s679, 8
      %s681 = scalar_lea.vmem %s13, %s680
      %p682 = pneg %p376
      %p683 = pneg %p373
      %p684 = scmp.lt.s32.totalorder %s27, 1
      %s685 = scalar_select %p684, %s27, 1
      %s686 = smul.addr %s685, 8
      %s687 = smul.addr %s686, 8
      %s688 = scalar_lea.vmem %s14, %s687
      %p689 = pneg %p402
      %p690 = pneg %p399
      %p691 = scmp.lt.s32.totalorder %s27, 1
      %s692 = scalar_select %p691, %s27, 1
      %s693 = smul.addr %s692, 2
      %s694 = smul.addr %s693, 8
      %s695 = scalar_lea.vmem %s15, %s694
      %p696 = pneg %p428
      %p697 = pneg %p425
      %p698 = pneg %p454
      %p699 = pneg %p451
      %p700 = scmp.lt.s32.totalorder %s27, 1
      %s701 = scalar_select %p700, %s27, 1
      %s702 = smul.addr %s701, 2
      %s703 = smul.addr %s702, 8
      %s704 = scalar_lea.vmem %s16, %s703
      %p705 = scmp.lt.s32.totalorder %s27, 1
      %s706 = scalar_select %p705, %s27, 1
      %s707 = smul.addr %s706, 8
      %s708 = scalar_lea.vmem %s2, %s707
      %p709 = scmp.lt.s32.totalorder %s27, 1
      %s710 = scalar_select %p709, %s27, 1
      %s711 = smul.addr %s710, 4
      %s712 = smul.addr %s711, 8
      %s713 = scalar_lea.vmem %s3, %s712
      %p714 = scmp.lt.s32.totalorder %s27, 1
      %s715 = scalar_select %p714, %s27, 1
      %s716 = smul.addr %s715, 4
      %s717 = smul.addr %s716, 8
      %s718 = scalar_lea.vmem %s4, %s717
      %p719 = scmp.lt.s32.totalorder %s27, 1
      %s720 = scalar_select %p719, %s27, 1
      %s721 = smul.addr %s720, 2
      %s722 = smul.addr %s721, 8
      %s723 = scalar_lea.vmem %s5, %s722
      %p724 = scmp.lt.s32.totalorder %s27, 1
      %s725 = scalar_select %p724, %s27, 1
      %s726 = smul.addr %s725, 2
      %s727 = smul.addr %s726, 8
      %s728 = scalar_lea.vmem %s6, %s727
      %p729 = scmp.lt.s32.totalorder %s27, 1
      %s730 = scalar_select %p729, %s27, 1
      %s731 = smul.addr %s730, 8
      %s732 = smul.addr %s731, 8
      %s733 = scalar_lea.vmem %s7, %s732
      %p734 = scmp.lt.s32.totalorder %s27, 1
      %s735 = scalar_select %p734, %s27, 1
      %s736 = smul.addr %s735, 8
      %s737 = smul.addr %s736, 8
      %s738 = scalar_lea.vmem %s8, %s737
      %p739 = scmp.lt.s32.totalorder %s27, 1
      %s740 = scalar_select %p739, %s27, 1
      %s741 = smul.addr %s740, 4
      %s742 = smul.addr %s741, 8
      %s743 = scalar_lea.vmem %s9, %s742
      %p744 = scmp.lt.s32.totalorder %s27, 1
      %s745 = scalar_select %p744, %s27, 1
      %s746 = smul.addr %s745, 4
      %s747 = smul.addr %s746, 8
      %s748 = scalar_lea.vmem %s10, %s747
      %p749 = scmp.lt.s32.totalorder %s27, 1
      %s750 = scalar_select %p749, %s27, 1
      %s751 = smul.addr %s750, 16
      %s752 = smul.addr %s751, 8
      %s753 = scalar_lea.vmem %s11, %s752
      %p754 = scmp.lt.s32.totalorder %s27, 1
      %s755 = scalar_select %p754, %s27, 1
      %s756 = smul.addr %s755, 16
      %s757 = smul.addr %s756, 8
      %s758 = scalar_lea.vmem %s12, %s757
      %p759 = scmp.lt.s32.totalorder %s27, 1
      %s760 = scalar_select %p759, %s27, 1
      %s761 = smul.addr %s760, 8
      %s762 = smul.addr %s761, 8
      %s763 = scalar_lea.vmem %s13, %s762
      %p764 = scmp.lt.s32.totalorder %s27, 1
      %s765 = scalar_select %p764, %s27, 1
      %s766 = smul.addr %s765, 8
      %s767 = smul.addr %s766, 8
      %s768 = scalar_lea.vmem %s14, %s767
      %p769 = scmp.lt.s32.totalorder %s27, 1
      %s770 = scalar_select %p769, %s27, 1
      %s771 = smul.addr %s770, 2
      %s772 = smul.addr %s771, 8
      %s773 = scalar_lea.vmem %s15, %s772
      %p774 = scmp.lt.s32.totalorder %s27, 1
      %s775 = scalar_select %p774, %s27, 1
      %s776 = smul.addr %s775, 2
      %s777 = smul.addr %s776, 8
      %s778 = scalar_lea.vmem %s16, %s777
      %v779 = vld [vmem:[%s0] sm:$0x1]
      %vm780 = vcmp.ge.s32.totalorder %v779, 1
      %v781 = vsel %vm780, 1, 0
      %v782 = vcvt.s32.f32 %v781
      %vm783 = vcmp.ge.s32.totalorder %v779, 2
      %v784 = vsel %vm783, 1, 0
      %v785 = vcvt.s32.f32 %v784
      %vm786 = vcmp.ge.s32.totalorder %v779, 4
      %v787 = vsel %vm786, 1, 0
      %v788 = vcvt.s32.f32 %v787
      %v789 = vld [vmem:[%s708] sm:$0xff]
      %v790 = vld [vmem:[%s713] sm:$0xff]
      %v791 = vld [vmem:[%s713 + $0x8] sm:$0xff]
      %v792 = vld [vmem:[%s713 + $0x10] sm:$0xff]
      %v793 = vld [vmem:[%s713 + $0x18] sm:$0xff]
      %v794 = vld [vmem:[%s718] sm:$0xff]
      %v795 = vld [vmem:[%s718 + $0x8] sm:$0xff]
      %v796 = vld [vmem:[%s718 + $0x10] sm:$0xff]
      %v797 = vld [vmem:[%s718 + $0x18] sm:$0xff]
      %v798 = vld [vmem:[%s723] sm:$0xff]
      %v799 = vld [vmem:[%s723 + $0x8] sm:$0xff]
      %v800 = vld [vmem:[%s728] sm:$0xff]
      %v801 = vld [vmem:[%s728 + $0x8] sm:$0xff]
      %vm802 = vcmask 1047808
      %803 = vrot.lane.b32.xlu0 %v789, 32
      %v804 = vpop.permute.xlu0 %803
      %v805 = vsel %vm802, %v804, %v789
      %806 = vrot.lane.b32.xlu0 %v805, 32
      %v807 = vpop.permute.xlu0 %806
      %v808 = vsel %vm802, %v807, %v789
      %v810 = vlaneseq
      %v811 = vshrl.u32 %v810, 7
      %v812 = vsub.s32 0, %v811
      %v813 = vrot.slane %v782, %v812
      %814 = vrot.lane.b32.xlu0 %v813, 31
      %v815 = vpop.permute.xlu0 %814
      %v817 = vmul.f32 %v808, %v815
      %819 = vrot.lane.b32.xlu0 %v789, 31
      %v820 = vpop.permute.xlu0 %819
      %822 = vset.pattern.permute.xlu0 0
      %823 = vperm.xlu0 %822, %v794
      %v824 = vpop.permute.xlu0 %823
      %827 = vset.pattern.permute.xlu0 0
      %828 = vperm.xlu0 %827, %v795
      %v829 = vpop.permute.xlu0 %828
      %832 = vset.pattern.permute.xlu0 0
      %833 = vperm.xlu0 %832, %v796
      %v834 = vpop.permute.xlu0 %833
      %837 = vset.pattern.permute.xlu0 0
      %838 = vperm.xlu0 %837, %v797
      %v839 = vpop.permute.xlu0 %838
      %842 = vrot.lane.b32.xlu0 %v817, 97
      %v843 = vpop.permute.xlu0 %842
      %844 = vrot.lane.b32.xlu0 %v820, 97
      %v845 = vpop.permute.xlu0 %844
      %vm848 = vcmask 130048
      %v850 = vsel %vm848, %v790, 0
      %v853 = vsel %vm848, %v791, 0
      %v856 = vsel %vm848, %v792, 0
      %v859 = vsel %vm848, %v793, 0
      %861 = vmatprep.subr.mxu0 0.0
      %862 = vmatpush1.msra.mxu0 %v843
      %863 = vmatprep.subr.mxu0 0.0
      %864 = vmatpush1.msra.mxu0 %v845
      %865 = vmatprep.subr.mxu0 0.0
      %866 = vmatpush1.msra.mxu0 0.0
      %867 = vmatprep.subr.mxu0 0.0
      %868 = vmatpush1.msra.mxu0 0.0
      %869 = vmatprep.subr.mxu0 0.0
      %870 = vmatpush1.msra.mxu0 0.0
      %871 = vmatprep.subr.mxu0 0.0
      %872 = vmatpush1.msra.mxu0 0.0
      %873 = vmatprep.subr.mxu0 0.0
      %874 = vmatpush1.msra.mxu0 0.0
      %875 = vmatprep.subr.mxu0 0.0
      %876 = vmatpush1.msra.mxu0 0.0
      %877 = vmatprep.subr.mxu0 0.0
      %878 = vmatpush1.msra.mxu0 0.0
      %879 = vmatprep.subr.mxu0 0.0
      %880 = vmatpush1.msra.mxu0 0.0
      %881 = vmatprep.subr.mxu0 0.0
      %882 = vmatpush1.msra.mxu0 0.0
      %883 = vmatprep.subr.mxu0 0.0
      %884 = vmatpush1.msra.mxu0 0.0
      %885 = vmatprep.subr.mxu0 0.0
      %886 = vmatpush1.msra.mxu0 0.0
      %887 = vmatprep.subr.mxu0 0.0
      %888 = vmatpush1.msra.mxu0 0.0
      %889 = vmatprep.subr.mxu0 0.0
      %890 = vmatpush1.msra.mxu0 0.0
      %891 = vmatprep.subr.mxu0 0.0
      %892 = vmatpush1.msra.mxu0 0.0
      %893 = vmatprep.subr.mxu0 0.0
      %894 = vmatpush1.msra.mxu0 0.0
      %895 = vmatprep.subr.mxu0 0.0
      %896 = vmatpush1.msra.mxu0 0.0
      %897 = vmatprep.subr.mxu0 0.0
      %898 = vmatpush1.msra.mxu0 0.0
      %899 = vmatprep.subr.mxu0 0.0
      %900 = vmatpush1.msra.mxu0 0.0
      %901 = vmatprep.subr.mxu0 0.0
      %902 = vmatpush1.msra.mxu0 0.0
      %903 = vmatprep.subr.mxu0 0.0
      %904 = vmatpush1.msra.mxu0 0.0
      %905 = vmatprep.subr.mxu0 0.0
      %906 = vmatpush1.msra.mxu0 0.0
      %907 = vmatprep.subr.mxu0 0.0
      %908 = vmatpush1.msra.mxu0 0.0
      %909 = vmatprep.subr.mxu0 0.0
      %910 = vmatpush1.msra.mxu0 0.0
      %911 = vmatprep.subr.mxu0 0.0
      %912 = vmatpush1.msra.mxu0 0.0
      %913 = vmatprep.subr.mxu0 0.0
      %914 = vmatpush1.msra.mxu0 0.0
      %915 = vmatprep.subr.mxu0 0.0
      %916 = vmatpush1.msra.mxu0 0.0
      %917 = vmatprep.subr.mxu0 0.0
      %918 = vmatpush1.msra.mxu0 0.0
      %919 = vmatprep.subr.mxu0 0.0
      %920 = vmatpush1.msra.mxu0 0.0
      %921 = vmatprep.subr.mxu0 0.0
      %922 = vmatpush1.msra.mxu0 0.0
      %923 = vmatprep.subr.mxu0 0.0
      %924 = vmatpush1.msra.mxu0 0.0
      %925 = vmatprep.mubr.f32.mxu0 0.0
      %926 = vmatmul.mubr.f32.gmra.mrb[0].mxu0 %v850
      %v927 = vpop.f32.mrb[0].mxu0
      %v928 = vadd.f32 %v824, %v927
      %v929 = vpop.f32.mrb[0].mxu0
      %930 = vmatprep.mubr.f32.mxu0 0.0
      %931 = vmatmul.mubr.f32.gmra.mrb[0].mxu0 %v853
      %v932 = vpop.f32.mrb[0].mxu0
      %v933 = vadd.f32 %v829, %v932
      %v934 = vpop.f32.mrb[0].mxu0
      %935 = vmatprep.mubr.f32.mxu0 0.0
      %936 = vmatmul.mubr.f32.gmra.mrb[0].mxu0 %v856
      %v937 = vpop.f32.mrb[0].mxu0
      %v938 = vadd.f32 %v834, %v937
      %v939 = vpop.f32.mrb[0].mxu0
      %940 = vmatprep.mubr.f32.mxu0 0.0
      %941 = vmatmul.mubr.f32.gmra.mrb[0].mxu0 %v859
      %v942 = vpop.f32.mrb[0].mxu0
      %v943 = vadd.f32 %v839, %v942
      %v944 = vpop.f32.mrb[0].mxu0
      %945 = vdwg.mxu0
      %v946 = vmax.f32 %v928, 0.0
      %v947 = vmax.f32 %v933, 0.0
      %948 = vrot.lane.b32.xlu0 %v946, 32
      %v949 = vpop.permute.xlu0 %948
      %v950 = vsel %vm802, %v949, %v946
      %951 = vrot.lane.b32.xlu0 %v947, 32
      %v952 = vpop.permute.xlu0 %951
      %v953 = vsel %vm802, %v952, %v947
      %954 = vrot.lane.b32.xlu0 %v950, 32
      %v955 = vpop.permute.xlu0 %954
      %956 = vrot.lane.b32.xlu0 %v953, 32
      %v957 = vpop.permute.xlu0 %956
      %v958 = vsel %vm802, %v955, %v946
      %v959 = vsel %vm802, %v957, %v947
      %v960 = vmul.f32 %v958, %v815
      %v961 = vmul.f32 %v959, %v815
      %964 = vrot.lane.b32.xlu0 %v946, 31
      %v965 = vpop.permute.xlu0 %964
      %966 = vrot.lane.b32.xlu0 %v947, 31
      %v967 = vpop.permute.xlu0 %966
      %969 = vset.pattern.permute.xlu0 0
      %970 = vperm.xlu0 %969, %v800
      %v971 = vpop.permute.xlu0 %970
      %974 = vset.pattern.permute.xlu0 0
      %975 = vperm.xlu0 %974, %v801
      %v976 = vpop.permute.xlu0 %975
      %980 = vrot.lane.b32.xlu0 %v960, 97
      %v981 = vpop.permute.xlu0 %980
      %982 = vrot.lane.b32.xlu0 %v961, 97
      %v983 = vpop.permute.xlu0 %982
      %984 = vrot.lane.b32.xlu0 %v965, 97
      %v985 = vpop.permute.xlu0 %984
      %986 = vrot.lane.b32.xlu0 %v967, 97
      %v987 = vpop.permute.xlu0 %986
      %vm992 = vcmask 261120
      %v994 = vsel %vm992, %v798, 0
      %v997 = vsel %vm992, %v799, 0
      %999 = vmatprep.subr.mxu0 0.0
      %1000 = vmatpush1.msra.mxu0 %v981
      %1001 = vmatprep.subr.mxu0 0.0
      %1002 = vmatpush1.msra.mxu0 %v983
      %1003 = vmatprep.subr.mxu0 0.0
      %1004 = vmatpush1.msra.mxu0 %v985
      %1005 = vmatprep.subr.mxu0 0.0
      %1006 = vmatpush1.msra.mxu0 %v987
      %1007 = vmatprep.subr.mxu0 0.0
      %1008 = vmatpush1.msra.mxu0 0.0
      %1009 = vmatprep.subr.mxu0 0.0
      %1010 = vmatpush1.msra.mxu0 0.0
      %1011 = vmatprep.subr.mxu0 0.0
      %1012 = vmatpush1.msra.mxu0 0.0
      %1013 = vmatprep.subr.mxu0 0.0
      %1014 = vmatpush1.msra.mxu0 0.0
      %1015 = vmatprep.subr.mxu0 0.0
      %1016 = vmatpush1.msra.mxu0 0.0
      %1017 = vmatprep.subr.mxu0 0.0
      %1018 = vmatpush1.msra.mxu0 0.0
      %1019 = vmatprep.subr.mxu0 0.0
      %1020 = vmatpush1.msra.mxu0 0.0
      %1021 = vmatprep.subr.mxu0 0.0
      %1022 = vmatpush1.msra.mxu0 0.0
      %1023 = vmatprep.subr.mxu0 0.0
      %1024 = vmatpush1.msra.mxu0 0.0
      %1025 = vmatprep.subr.mxu0 0.0
      %1026 = vmatpush1.msra.mxu0 0.0
      %1027 = vmatprep.subr.mxu0 0.0
      %1028 = vmatpush1.msra.mxu0 0.0
      %1029 = vmatprep.subr.mxu0 0.0
      %1030 = vmatpush1.msra.mxu0 0.0
      %1031 = vmatprep.subr.mxu0 0.0
      %1032 = vmatpush1.msra.mxu0 0.0
      %1033 = vmatprep.subr.mxu0 0.0
      %1034 = vmatpush1.msra.mxu0 0.0
      %1035 = vmatprep.subr.mxu0 0.0
      %1036 = vmatpush1.msra.mxu0 0.0
      %1037 = vmatprep.subr.mxu0 0.0
      %1038 = vmatpush1.msra.mxu0 0.0
      %1039 = vmatprep.subr.mxu0 0.0
      %1040 = vmatpush1.msra.mxu0 0.0
      %1041 = vmatprep.subr.mxu0 0.0
      %1042 = vmatpush1.msra.mxu0 0.0
      %1043 = vmatprep.subr.mxu0 0.0
      %1044 = vmatpush1.msra.mxu0 0.0
      %1045 = vmatprep.subr.mxu0 0.0
      %1046 = vmatpush1.msra.mxu0 0.0
      %1047 = vmatprep.subr.mxu0 0.0
      %1048 = vmatpush1.msra.mxu0 0.0
      %1049 = vmatprep.subr.mxu0 0.0
      %1050 = vmatpush1.msra.mxu0 0.0
      %1051 = vmatprep.subr.mxu0 0.0
      %1052 = vmatpush1.msra.mxu0 0.0
      %1053 = vmatprep.subr.mxu0 0.0
      %1054 = vmatpush1.msra.mxu0 0.0
      %1055 = vmatprep.subr.mxu0 0.0
      %1056 = vmatpush1.msra.mxu0 0.0
      %1057 = vmatprep.subr.mxu0 0.0
      %1058 = vmatpush1.msra.mxu0 0.0
      %1059 = vmatprep.subr.mxu0 0.0
      %1060 = vmatpush1.msra.mxu0 0.0
      %1061 = vmatprep.subr.mxu0 0.0
      %1062 = vmatpush1.msra.mxu0 0.0
      %1063 = vmatprep.mubr.f32.mxu0 0.0
      %1064 = vmatmul.mubr.f32.gmra.mrb[0].mxu0 %v994
      %v1065 = vpop.f32.mrb[0].mxu0
      %v1066 = vadd.f32 %v971, %v1065
      %v1067 = vpop.f32.mrb[0].mxu0
      %1068 = vmatprep.mubr.f32.mxu0 0.0
      %1069 = vmatmul.mubr.f32.gmra.mrb[0].mxu0 %v997
      %v1070 = vpop.f32.mrb[0].mxu0
      %v1071 = vadd.f32 %v976, %v1070
      %v1072 = vpop.f32.mrb[0].mxu0
      %1073 = vdwg.mxu0
      %v1074 = vmax.f32 %v1066, 0.0
      %v1075 = vmax.f32 %v1071, 0.0
      %v1076 = vadd.f32 %v1074, %v938
      %v1077 = vadd.f32 %v1075, %v943
      %v1078 = vld [vmem:[%s733] sm:$0xff]
      %v1079 = vld [vmem:[%s733 + $0x8] sm:$0xff]
      %v1080 = vld [vmem:[%s733 + $0x10] sm:$0xff]
      %v1081 = vld [vmem:[%s733 + $0x18] sm:$0xff]
      %v1082 = vld [vmem:[%s733 + $0x20] sm:$0xff]
      %v1083 = vld [vmem:[%s733 + $0x28] sm:$0xff]
      %v1084 = vld [vmem:[%s733 + $0x30] sm:$0xff]
      %v1085 = vld [vmem:[%s733 + $0x38] sm:$0xff]
      %v1086 = vld [vmem:[%s738] sm:$0xff]
      %v1087 = vld [vmem:[%s738 + $0x8] sm:$0xff]
      %v1088 = vld [vmem:[%s738 + $0x10] sm:$0xff]
      %v1089 = vld [vmem:[%s738 + $0x18] sm:$0xff]
      %v1090 = vld [vmem:[%s738 + $0x20] sm:$0xff]
      %v1091 = vld [vmem:[%s738 + $0x28] sm:$0xff]
      %v1092 = vld [vmem:[%s738 + $0x30] sm:$0xff]
      %v1093 = vld [vmem:[%s738 + $0x38] sm:$0xff]
      %v1094 = vld [vmem:[%s743] sm:$0xff]
      %v1095 = vld [vmem:[%s743 + $0x8] sm:$0xff]
      %v1096 = vld [vmem:[%s743 + $0x10] sm:$0xff]
      %v1097 = vld [vmem:[%s743 + $0x18] sm:$0xff]
      %v1098 = vld [vmem:[%s748] sm:$0xff]
      %v1099 = vld [vmem:[%s748 + $0x8] sm:$0xff]
      %v1100 = vld [vmem:[%s748 + $0x10] sm:$0xff]
      %v1101 = vld [vmem:[%s748 + $0x18] sm:$0xff]
      %1102 = vrot.lane.b32.xlu0 %v1076, 32
      %v1103 = vpop.permute.xlu0 %1102
      %v1104 = vsel %vm802, %v1103, %v1076
      %1105 = vrot.lane.b32.xlu0 %v1077, 32
      %v1106 = vpop.permute.xlu0 %1105
      %v1107 = vsel %vm802, %v1106, %v1077
      %1108 = vrot.lane.b32.xlu0 %v1104, 32
      %v1109 = vpop.permute.xlu0 %1108
      %1110 = vrot.lane.b32.xlu0 %v1107, 32
      %v1111 = vpop.permute.xlu0 %1110
      %v1112 = vsel %vm802, %v1109, %v1076
      %v1113 = vsel %vm802, %v1111, %v1077
      %v1115 = vlaneseq
      %v1116 = vshrl.u32 %v1115, 7
      %v1117 = vsub.s32 0, %v1116
      %v1118 = vrot.slane %v785, %v1117
      %1119 = vrot.lane.b32.xlu0 %v1118, 30
      %v1120 = vpop.permute.xlu0 %1119
      %v1122 = vmul.f32 %v1112, %v1120
      %v1123 = vmul.f32 %v1113, %v1120
      %1126 = vrot.lane.b32.xlu0 %v1076, 30
      %v1127 = vpop.permute.xlu0 %1126
      %1128 = vrot.lane.b32.xlu0 %v1077, 30
      %v1129 = vpop.permute.xlu0 %1128
      %1131 = vset.pattern.permute.xlu0 0
      %1132 = vperm.xlu0 %1131, %v1086
      %v1133 = vpop.permute.xlu0 %1132
      %1136 = vset.pattern.permute.xlu0 0
      %1137 = vperm.xlu0 %1136, %v1087
      %v1138 = vpop.permute.xlu0 %1137
      %1141 = vset.pattern.permute.xlu0 0
      %1142 = vperm.xlu0 %1141, %v1088
      %v1143 = vpop.permute.xlu0 %1142
      %1146 = vset.pattern.permute.xlu0 0
      %1147 = vperm.xlu0 %1146, %v1089
      %v1148 = vpop.permute.xlu0 %1147
      %1151 = vset.pattern.permute.xlu0 0
      %1152 = vperm.xlu0 %1151, %v1090
      %v1153 = vpop.permute.xlu0 %1152
      %1156 = vset.pattern.permute.xlu0 0
      %1157 = vperm.xlu0 %1156, %v1091
      %v1158 = vpop.permute.xlu0 %1157
      %1161 = vset.pattern.permute.xlu0 0
      %1162 = vperm.xlu0 %1161, %v1092
      %v1163 = vpop.permute.xlu0 %1162
      %1166 = vset.pattern.permute.xlu0 0
      %1167 = vperm.xlu0 %1166, %v1093
      %v1168 = vpop.permute.xlu0 %1167
      %1172 = vrot.lane.b32.xlu0 %v1122, 98
      %v1173 = vpop.permute.xlu0 %1172
      %1174 = vrot.lane.b32.xlu0 %v1123, 98
      %v1175 = vpop.permute.xlu0 %1174
      %1176 = vrot.lane.b32.xlu0 %v1127, 98
      %v1177 = vpop.permute.xlu0 %1176
      %1178 = vrot.lane.b32.xlu0 %v1129, 98
      %v1179 = vpop.permute.xlu0 %1178
      %v1185 = vsel %vm992, %v1078, 0
      %v1188 = vsel %vm992, %v1079, 0
      %v1191 = vsel %vm992, %v1080, 0
      %v1194 = vsel %vm992, %v1081, 0
      %v1197 = vsel %vm992, %v1082, 0
      %v1200 = vsel %vm992, %v1083, 0
      %v1203 = vsel %vm992, %v1084, 0
      %v1206 = vsel %vm992, %v1085, 0
      %1208 = vmatprep.subr.mxu0 0.0
      %1209 = vmatpush1.msra.mxu0 %v1173
      %1210 = vmatprep.subr.mxu0 0.0
      %1211 = vmatpush1.msra.mxu0 %v1175
      %1212 = vmatprep.subr.mxu0 0.0
      %1213 = vmatpush1.msra.mxu0 %v1177
      %1214 = vmatprep.subr.mxu0 0.0
      %1215 = vmatpush1.msra.mxu0 %v1179
      %1216 = vmatprep.subr.mxu0 0.0
      %1217 = vmatpush1.msra.mxu0 0.0
      %1218 = vmatprep.subr.mxu0 0.0
      %1219 = vmatpush1.msra.mxu0 0.0
      %1220 = vmatprep.subr.mxu0 0.0
      %1221 = vmatpush1.msra.mxu0 0.0
      %1222 = vmatprep.subr.mxu0 0.0
      %1223 = vmatpush1.msra.mxu0 0.0
      %1224 = vmatprep.subr.mxu0 0.0
      %1225 = vmatpush1.msra.mxu0 0.0
      %1226 = vmatprep.subr.mxu0 0.0
      %1227 = vmatpush1.msra.mxu0 0.0
      %1228 = vmatprep.subr.mxu0 0.0
      %1229 = vmatpush1.msra.mxu0 0.0
      %1230 = vmatprep.subr.mxu0 0.0
      %1231 = vmatpush1.msra.mxu0 0.0
      %1232 = vmatprep.subr.mxu0 0.0
      %1233 = vmatpush1.msra.mxu0 0.0
      %1234 = vmatprep.subr.mxu0 0.0
      %1235 = vmatpush1.msra.mxu0 0.0
      %1236 = vmatprep.subr.mxu0 0.0
      %1237 = vmatpush1.msra.mxu0 0.0
      %1238 = vmatprep.subr.mxu0 0.0
      %1239 = vmatpush1.msra.mxu0 0.0
      %1240 = vmatprep.subr.mxu0 0.0
      %1241 = vmatpush1.msra.mxu0 0.0
      %1242 = vmatprep.subr.mxu0 0.0
      %1243 = vmatpush1.msra.mxu0 0.0
      %1244 = vmatprep.subr.mxu0 0.0
      %1245 = vmatpush1.msra.mxu0 0.0
      %1246 = vmatprep.subr.mxu0 0.0
      %1247 = vmatpush1.msra.mxu0 0.0
      %1248 = vmatprep.subr.mxu0 0.0
      %1249 = vmatpush1.msra.mxu0 0.0
      %1250 = vmatprep.subr.mxu0 0.0
      %1251 = vmatpush1.msra.mxu0 0.0
      %1252 = vmatprep.subr.mxu0 0.0
      %1253 = vmatpush1.msra.mxu0 0.0
      %1254 = vmatprep.subr.mxu0 0.0
      %1255 = vmatpush1.msra.mxu0 0.0
      %1256 = vmatprep.subr.mxu0 0.0
      %1257 = vmatpush1.msra.mxu0 0.0
      %1258 = vmatprep.subr.mxu0 0.0
      %1259 = vmatpush1.msra.mxu0 0.0
      %1260 = vmatprep.subr.mxu0 0.0
      %1261 = vmatpush1.msra.mxu0 0.0
      %1262 = vmatprep.subr.mxu0 0.0
      %1263 = vmatpush1.msra.mxu0 0.0
      %1264 = vmatprep.subr.mxu0 0.0
      %1265 = vmatpush1.msra.mxu0 0.0
      %1266 = vmatprep.subr.mxu0 0.0
      %1267 = vmatpush1.msra.mxu0 0.0
      %1268 = vmatprep.subr.mxu0 0.0
      %1269 = vmatpush1.msra.mxu0 0.0
      %1270 = vmatprep.subr.mxu0 0.0
      %1271 = vmatpush1.msra.mxu0 0.0
      %1272 = vmatprep.mubr.f32.mxu0 0.0
      %1273 = vmatmul.mubr.f32.gmra.mrb[0].mxu0 %v1185
      %v1274 = vpop.f32.mrb[0].mxu0
      %v1275 = vadd.f32 %v1133, %v1274
      %v1276 = vpop.f32.mrb[0].mxu0
      %1277 = vmatprep.mubr.f32.mxu0 0.0
      %1278 = vmatmul.mubr.f32.gmra.mrb[0].mxu0 %v1188
      %v1279 = vpop.f32.mrb[0].mxu0
      %v1280 = vadd.f32 %v1138, %v1279
      %v1281 = vpop.f32.mrb[0].mxu0
      %1282 = vmatprep.mubr.f32.mxu0 0.0
      %1283 = vmatmul.mubr.f32.gmra.mrb[0].mxu0 %v1191
      %v1284 = vpop.f32.mrb[0].mxu0
      %v1285 = vadd.f32 %v1143, %v1284
      %v1286 = vpop.f32.mrb[0].mxu0
      %1287 = vmatprep.mubr.f32.mxu0 0.0
      %1288 = vmatmul.mubr.f32.gmra.mrb[0].mxu0 %v1194
      %v1289 = vpop.f32.mrb[0].mxu0
      %v1290 = vadd.f32 %v1148, %v1289
      %v1291 = vpop.f32.mrb[0].mxu0
      %1292 = vmatprep.mubr.f32.mxu0 0.0
      %1293 = vmatmul.mubr.f32.gmra.mrb[0].mxu0 %v1197
      %v1294 = vpop.f32.mrb[0].mxu0
      %v1295 = vadd.f32 %v1153, %v1294
      %v1296 = vpop.f32.mrb[0].mxu0
      %1297 = vmatprep.mubr.f32.mxu0 0.0
      %1298 = vmatmul.mubr.f32.gmra.mrb[0].mxu0 %v1200
      %v1299 = vpop.f32.mrb[0].mxu0
      %v1300 = vadd.f32 %v1158, %v1299
      %v1301 = vpop.f32.mrb[0].mxu0
      %1302 = vmatprep.mubr.f32.mxu0 0.0
      %1303 = vmatmul.mubr.f32.gmra.mrb[0].mxu0 %v1203
      %v1304 = vpop.f32.mrb[0].mxu0
      %v1305 = vadd.f32 %v1163, %v1304
      %v1306 = vpop.f32.mrb[0].mxu0
      %1307 = vmatprep.mubr.f32.mxu0 0.0
      %1308 = vmatmul.mubr.f32.gmra.mrb[0].mxu0 %v1206
      %v1309 = vpop.f32.mrb[0].mxu0
      %v1310 = vadd.f32 %v1168, %v1309
      %v1311 = vpop.f32.mrb[0].mxu0
      %1312 = vdwg.mxu0
      %v1313 = vmax.f32 %v1275, 0.0
      %v1314 = vmax.f32 %v1280, 0.0
      %v1315 = vmax.f32 %v1285, 0.0
      %v1316 = vmax.f32 %v1290, 0.0
      %1317 = vrot.lane.b32.xlu0 %v1313, 32
      %v1318 = vpop.permute.xlu0 %1317
      %v1319 = vsel %vm802, %v1318, %v1313
      %1320 = vrot.lane.b32.xlu0 %v1314, 32
      %v1321 = vpop.permute.xlu0 %1320
      %v1322 = vsel %vm802, %v1321, %v1314
      %1323 = vrot.lane.b32.xlu0 %v1315, 32
      %v1324 = vpop.permute.xlu0 %1323
      %v1325 = vsel %vm802, %v1324, %v1315
      %1326 = vrot.lane.b32.xlu0 %v1316, 32
      %v1327 = vpop.permute.xlu0 %1326
      %v1328 = vsel %vm802, %v1327, %v1316
      %1329 = vrot.lane.b32.xlu0 %v1319, 32
      %v1330 = vpop.permute.xlu0 %1329
      %1331 = vrot.lane.b32.xlu0 %v1322, 32
      %v1332 = vpop.permute.xlu0 %1331
      %1333 = vrot.lane.b32.xlu0 %v1325, 32
      %v1334 = vpop.permute.xlu0 %1333
      %1335 = vrot.lane.b32.xlu0 %v1328, 32
      %v1336 = vpop.permute.xlu0 %1335
      %v1337 = vsel %vm802, %v1330, %v1313
      %v1338 = vsel %vm802, %v1332, %v1314
      %v1339 = vsel %vm802, %v1334, %v1315
      %v1340 = vsel %vm802, %v1336, %v1316
      %v1341 = vmul.f32 %v1337, %v1120
      %v1342 = vmul.f32 %v1338, %v1120
      %v1343 = vmul.f32 %v1339, %v1120
      %v1344 = vmul.f32 %v1340, %v1120
      %1349 = vrot.lane.b32.xlu0 %v1313, 30
      %v1350 = vpop.permute.xlu0 %1349
      %1351 = vrot.lane.b32.xlu0 %v1314, 30
      %v1352 = vpop.permute.xlu0 %1351
      %1353 = vrot.lane.b32.xlu0 %v1315, 30
      %v1354 = vpop.permute.xlu0 %1353
      %1355 = vrot.lane.b32.xlu0 %v1316, 30
      %v1356 = vpop.permute.xlu0 %1355
      %1358 = vset.pattern.permute.xlu0 0
      %1359 = vperm.xlu0 %1358, %v1098
      %v1360 = vpop.permute.xlu0 %1359
      %1363 = vset.pattern.permute.xlu0 0
      %1364 = vperm.xlu0 %1363, %v1099
      %v1365 = vpop.permute.xlu0 %1364
      %1368 = vset.pattern.permute.xlu0 0
      %1369 = vperm.xlu0 %1368, %v1100
      %v1370 = vpop.permute.xlu0 %1369
      %1373 = vset.pattern.permute.xlu0 0
      %1374 = vperm.xlu0 %1373, %v1101
      %v1375 = vpop.permute.xlu0 %1374
      %1381 = vrot.lane.b32.xlu0 %v1341, 98
      %v1382 = vpop.permute.xlu0 %1381
      %1383 = vrot.lane.b32.xlu0 %v1342, 98
      %v1384 = vpop.permute.xlu0 %1383
      %1385 = vrot.lane.b32.xlu0 %v1343, 98
      %v1386 = vpop.permute.xlu0 %1385
      %1387 = vrot.lane.b32.xlu0 %v1344, 98
      %v1388 = vpop.permute.xlu0 %1387
      %1389 = vrot.lane.b32.xlu0 %v1350, 98
      %v1390 = vpop.permute.xlu0 %1389
      %1391 = vrot.lane.b32.xlu0 %v1352, 98
      %v1392 = vpop.permute.xlu0 %1391
      %1393 = vrot.lane.b32.xlu0 %v1354, 98
      %v1394 = vpop.permute.xlu0 %1393
      %1395 = vrot.lane.b32.xlu0 %v1356, 98
      %v1396 = vpop.permute.xlu0 %1395
      %vm1405 = vcmask 523264
      %v1407 = vsel %vm1405, %v1094, 0
      %v1410 = vsel %vm1405, %v1095, 0
      %v1413 = vsel %vm1405, %v1096, 0
      %v1416 = vsel %vm1405, %v1097, 0
      %1418 = vmatprep.subr.mxu0 0.0
      %1419 = vmatpush1.msra.mxu0 %v1382
      %1420 = vmatprep.subr.mxu0 0.0
      %1421 = vmatpush1.msra.mxu0 %v1384
      %1422 = vmatprep.subr.mxu0 0.0
      %1423 = vmatpush1.msra.mxu0 %v1386
      %1424 = vmatprep.subr.mxu0 0.0
      %1425 = vmatpush1.msra.mxu0 %v1388
      %1426 = vmatprep.subr.mxu0 0.0
      %1427 = vmatpush1.msra.mxu0 %v1390
      %1428 = vmatprep.subr.mxu0 0.0
      %1429 = vmatpush1.msra.mxu0 %v1392
      %1430 = vmatprep.subr.mxu0 0.0
      %1431 = vmatpush1.msra.mxu0 %v1394
      %1432 = vmatprep.subr.mxu0 0.0
      %1433 = vmatpush1.msra.mxu0 %v1396
      %1434 = vmatprep.subr.mxu0 0.0
      %1435 = vmatpush1.msra.mxu0 0.0
      %1436 = vmatprep.subr.mxu0 0.0
      %1437 = vmatpush1.msra.mxu0 0.0
      %1438 = vmatprep.subr.mxu0 0.0
      %1439 = vmatpush1.msra.mxu0 0.0
      %1440 = vmatprep.subr.mxu0 0.0
      %1441 = vmatpush1.msra.mxu0 0.0
      %1442 = vmatprep.subr.mxu0 0.0
      %1443 = vmatpush1.msra.mxu0 0.0
      %1444 = vmatprep.subr.mxu0 0.0
      %1445 = vmatpush1.msra.mxu0 0.0
      %1446 = vmatprep.subr.mxu0 0.0
      %1447 = vmatpush1.msra.mxu0 0.0
      %1448 = vmatprep.subr.mxu0 0.0
      %1449 = vmatpush1.msra.mxu0 0.0
      %1450 = vmatprep.subr.mxu0 0.0
      %1451 = vmatpush1.msra.mxu0 0.0
      %1452 = vmatprep.subr.mxu0 0.0
      %1453 = vmatpush1.msra.mxu0 0.0
      %1454 = vmatprep.subr.mxu0 0.0
      %1455 = vmatpush1.msra.mxu0 0.0
      %1456 = vmatprep.subr.mxu0 0.0
      %1457 = vmatpush1.msra.mxu0 0.0
      %1458 = vmatprep.subr.mxu0 0.0
      %1459 = vmatpush1.msra.mxu0 0.0
      %1460 = vmatprep.subr.mxu0 0.0
      %1461 = vmatpush1.msra.mxu0 0.0
      %1462 = vmatprep.subr.mxu0 0.0
      %1463 = vmatpush1.msra.mxu0 0.0
      %1464 = vmatprep.subr.mxu0 0.0
      %1465 = vmatpush1.msra.mxu0 0.0
      %1466 = vmatprep.subr.mxu0 0.0
      %1467 = vmatpush1.msra.mxu0 0.0
      %1468 = vmatprep.subr.mxu0 0.0
      %1469 = vmatpush1.msra.mxu0 0.0
      %1470 = vmatprep.subr.mxu0 0.0
      %1471 = vmatpush1.msra.mxu0 0.0
      %1472 = vmatprep.subr.mxu0 0.0
      %1473 = vmatpush1.msra.mxu0 0.0
      %1474 = vmatprep.subr.mxu0 0.0
      %1475 = vmatpush1.msra.mxu0 0.0
      %1476 = vmatprep.subr.mxu0 0.0
      %1477 = vmatpush1.msra.mxu0 0.0
      %1478 = vmatprep.subr.mxu0 0.0
      %1479 = vmatpush1.msra.mxu0 0.0
      %1480 = vmatprep.subr.mxu0 0.0
      %1481 = vmatpush1.msra.mxu0 0.0
      %1482 = vmatprep.mubr.f32.mxu0 0.0
      %1483 = vmatmul.mubr.f32.gmra.mrb[0].mxu0 %v1407
      %v1484 = vpop.f32.mrb[0].mxu0
      %v1485 = vadd.f32 %v1360, %v1484
      %v1486 = vpop.f32.mrb[0].mxu0
      %1487 = vmatprep.mubr.f32.mxu0 0.0
      %1488 = vmatmul.mubr.f32.gmra.mrb[0].mxu0 %v1410
      %v1489 = vpop.f32.mrb[0].mxu0
      %v1490 = vadd.f32 %v1365, %v1489
      %v1491 = vpop.f32.mrb[0].mxu0
      %1492 = vmatprep.mubr.f32.mxu0 0.0
      %1493 = vmatmul.mubr.f32.gmra.mrb[0].mxu0 %v1413
      %v1494 = vpop.f32.mrb[0].mxu0
      %v1495 = vadd.f32 %v1370, %v1494
      %v1496 = vpop.f32.mrb[0].mxu0
      %1497 = vmatprep.mubr.f32.mxu0 0.0
      %1498 = vmatmul.mubr.f32.gmra.mrb[0].mxu0 %v1416
      %v1499 = vpop.f32.mrb[0].mxu0
      %v1500 = vadd.f32 %v1375, %v1499
      %v1501 = vpop.f32.mrb[0].mxu0
      %1502 = vdwg.mxu0
      %v1503 = vmax.f32 %v1485, 0.0
      %v1504 = vmax.f32 %v1490, 0.0
      %v1505 = vmax.f32 %v1495, 0.0
      %v1506 = vmax.f32 %v1500, 0.0
      %v1507 = vadd.f32 %v1503, %v1295
      %v1508 = vadd.f32 %v1504, %v1300
      %v1509 = vadd.f32 %v1505, %v1305
      %v1510 = vadd.f32 %v1506, %v1310
      %v1511 = vld [vmem:[%s753] sm:$0xff]
      %v1512 = vld [vmem:[%s753 + $0x8] sm:$0xff]
      %v1513 = vld [vmem:[%s753 + $0x10] sm:$0xff]
      %v1514 = vld [vmem:[%s753 + $0x18] sm:$0xff]
      %v1515 = vld [vmem:[%s753 + $0x20] sm:$0xff]
      %v1516 = vld [vmem:[%s753 + $0x28] sm:$0xff]
      %v1517 = vld [vmem:[%s753 + $0x30] sm:$0xff]
      %v1518 = vld [vmem:[%s753 + $0x38] sm:$0xff]
      %v1519 = vld [vmem:[%s753 + $0x40] sm:$0xff]
      %v1520 = vld [vmem:[%s753 + $0x48] sm:$0xff]
      %v1521 = vld [vmem:[%s753 + $0x50] sm:$0xff]
      %v1522 = vld [vmem:[%s753 + $0x58] sm:$0xff]
      %v1523 = vld [vmem:[%s753 + $0x60] sm:$0xff]
      %v1524 = vld [vmem:[%s753 + $0x68] sm:$0xff]
      %v1525 = vld [vmem:[%s753 + $0x70] sm:$0xff]
      %v1526 = vld [vmem:[%s753 + $0x78] sm:$0xff]
      %v1527 = vld [vmem:[%s758] sm:$0xff]
      %v1528 = vld [vmem:[%s758 + $0x8] sm:$0xff]
      %v1529 = vld [vmem:[%s758 + $0x10] sm:$0xff]
      %v1530 = vld [vmem:[%s758 + $0x18] sm:$0xff]
      %v1531 = vld [vmem:[%s758 + $0x20] sm:$0xff]
      %v1532 = vld [vmem:[%s758 + $0x28] sm:$0xff]
      %v1533 = vld [vmem:[%s758 + $0x30] sm:$0xff]
      %v1534 = vld [vmem:[%s758 + $0x38] sm:$0xff]
      %v1535 = vld [vmem:[%s758 + $0x40] sm:$0xff]
      %v1536 = vld [vmem:[%s758 + $0x48] sm:$0xff]
      %v1537 = vld [vmem:[%s758 + $0x50] sm:$0xff]
      %v1538 = vld [vmem:[%s758 + $0x58] sm:$0xff]
      %v1539 = vld [vmem:[%s758 + $0x60] sm:$0xff]
      %v1540 = vld [vmem:[%s758 + $0x68] sm:$0xff]
      %v1541 = vld [vmem:[%s758 + $0x70] sm:$0xff]
      %v1542 = vld [vmem:[%s758 + $0x78] sm:$0xff]
      %v1543 = vld [vmem:[%s763] sm:$0xff]
      %v1544 = vld [vmem:[%s763 + $0x8] sm:$0xff]
      %v1545 = vld [vmem:[%s763 + $0x10] sm:$0xff]
      %v1546 = vld [vmem:[%s763 + $0x18] sm:$0xff]
      %v1547 = vld [vmem:[%s763 + $0x20] sm:$0xff]
      %v1548 = vld [vmem:[%s763 + $0x28] sm:$0xff]
      %v1549 = vld [vmem:[%s763 + $0x30] sm:$0xff]
      %v1550 = vld [vmem:[%s763 + $0x38] sm:$0xff]
      %v1551 = vld [vmem:[%s768] sm:$0xff]
      %v1552 = vld [vmem:[%s768 + $0x8] sm:$0xff]
      %v1553 = vld [vmem:[%s768 + $0x10] sm:$0xff]
      %v1554 = vld [vmem:[%s768 + $0x18] sm:$0xff]
      %v1555 = vld [vmem:[%s768 + $0x20] sm:$0xff]
      %v1556 = vld [vmem:[%s768 + $0x28] sm:$0xff]
      %v1557 = vld [vmem:[%s768 + $0x30] sm:$0xff]
      %v1558 = vld [vmem:[%s768 + $0x38] sm:$0xff]
      %1559 = vrot.lane.b32.xlu0 %v1507, 32
      %v1560 = vpop.permute.xlu0 %1559
      %v1561 = vsel %vm802, %v1560, %v1507
      %1562 = vrot.lane.b32.xlu0 %v1508, 32
      %v1563 = vpop.permute.xlu0 %1562
      %v1564 = vsel %vm802, %v1563, %v1508
      %1565 = vrot.lane.b32.xlu0 %v1509, 32
      %v1566 = vpop.permute.xlu0 %1565
      %v1567 = vsel %vm802, %v1566, %v1509
      %1568 = vrot.lane.b32.xlu0 %v1510, 32
      %v1569 = vpop.permute.xlu0 %1568
      %v1570 = vsel %vm802, %v1569, %v1510
      %1571 = vrot.lane.b32.xlu0 %v1561, 32
      %v1572 = vpop.permute.xlu0 %1571
      %1573 = vrot.lane.b32.xlu0 %v1564, 32
      %v1574 = vpop.permute.xlu0 %1573
      %1575 = vrot.lane.b32.xlu0 %v1567, 32
      %v1576 = vpop.permute.xlu0 %1575
      %1577 = vrot.lane.b32.xlu0 %v1570, 32
      %v1578 = vpop.permute.xlu0 %1577
      %v1579 = vsel %vm802, %v1572, %v1507
      %v1580 = vsel %vm802, %v1574, %v1508
      %v1581 = vsel %vm802, %v1576, %v1509
      %v1582 = vsel %vm802, %v1578, %v1510
      %v1584 = vlaneseq
      %v1585 = vshrl.u32 %v1584, 7
      %v1586 = vsub.s32 0, %v1585
      %v1587 = vrot.slane %v788, %v1586
      %1588 = vrot.lane.b32.xlu0 %v1587, 28
      %v1589 = vpop.permute.xlu0 %1588
      %v1591 = vmul.f32 %v1579, %v1589
      %v1592 = vmul.f32 %v1580, %v1589
      %v1593 = vmul.f32 %v1581, %v1589
      %v1594 = vmul.f32 %v1582, %v1589
      %1599 = vrot.lane.b32.xlu0 %v1507, 28
      %v1600 = vpop.permute.xlu0 %1599
      %1601 = vrot.lane.b32.xlu0 %v1508, 28
      %v1602 = vpop.permute.xlu0 %1601
      %1603 = vrot.lane.b32.xlu0 %v1509, 28
      %v1604 = vpop.permute.xlu0 %1603
      %1605 = vrot.lane.b32.xlu0 %v1510, 28
      %v1606 = vpop.permute.xlu0 %1605
      %1608 = vset.pattern.permute.xlu0 0
      %1609 = vperm.xlu0 %1608, %v1527
      %v1610 = vpop.permute.xlu0 %1609
      %1613 = vset.pattern.permute.xlu0 0
      %1614 = vperm.xlu0 %1613, %v1528
      %v1615 = vpop.permute.xlu0 %1614
      %1618 = vset.pattern.permute.xlu0 0
      %1619 = vperm.xlu0 %1618, %v1529
      %v1620 = vpop.permute.xlu0 %1619
      %1623 = vset.pattern.permute.xlu0 0
      %1624 = vperm.xlu0 %1623, %v1530
      %v1625 = vpop.permute.xlu0 %1624
      %1628 = vset.pattern.permute.xlu0 0
      %1629 = vperm.xlu0 %1628, %v1531
      %v1630 = vpop.permute.xlu0 %1629
      %1633 = vset.pattern.permute.xlu0 0
      %1634 = vperm.xlu0 %1633, %v1532
      %v1635 = vpop.permute.xlu0 %1634
      %1638 = vset.pattern.permute.xlu0 0
      %1639 = vperm.xlu0 %1638, %v1533
      %v1640 = vpop.permute.xlu0 %1639
      %1643 = vset.pattern.permute.xlu0 0
      %1644 = vperm.xlu0 %1643, %v1534
      %v1645 = vpop.permute.xlu0 %1644
      %1648 = vset.pattern.permute.xlu0 0
      %1649 = vperm.xlu0 %1648, %v1535
      %v1650 = vpop.permute.xlu0 %1649
      %1653 = vset.pattern.permute.xlu0 0
      %1654 = vperm.xlu0 %1653, %v1536
      %v1655 = vpop.permute.xlu0 %1654
      %1658 = vset.pattern.permute.xlu0 0
      %1659 = vperm.xlu0 %1658, %v1537
      %v1660 = vpop.permute.xlu0 %1659
      %1663 = vset.pattern.permute.xlu0 0
      %1664 = vperm.xlu0 %1663, %v1538
      %v1665 = vpop.permute.xlu0 %1664
      %1668 = vset.pattern.permute.xlu0 0
      %1669 = vperm.xlu0 %1668, %v1539
      %v1670 = vpop.permute.xlu0 %1669
      %1673 = vset.pattern.permute.xlu0 0
      %1674 = vperm.xlu0 %1673, %v1540
      %v1675 = vpop.permute.xlu0 %1674
      %1678 = vset.pattern.permute.xlu0 0
      %1679 = vperm.xlu0 %1678, %v1541
      %v1680 = vpop.permute.xlu0 %1679
      %1683 = vset.pattern.permute.xlu0 0
      %1684 = vperm.xlu0 %1683, %v1542
      %v1685 = vpop.permute.xlu0 %1684
      %1691 = vrot.lane.b32.xlu0 %v1591, 100
      %v1692 = vpop.permute.xlu0 %1691
      %1693 = vrot.lane.b32.xlu0 %v1592, 100
      %v1694 = vpop.permute.xlu0 %1693
      %1695 = vrot.lane.b32.xlu0 %v1593, 100
      %v1696 = vpop.permute.xlu0 %1695
      %1697 = vrot.lane.b32.xlu0 %v1594, 100
      %v1698 = vpop.permute.xlu0 %1697
      %1699 = vrot.lane.b32.xlu0 %v1600, 100
      %v1700 = vpop.permute.xlu0 %1699
      %1701 = vrot.lane.b32.xlu0 %v1602, 100
      %v1702 = vpop.permute.xlu0 %1701
      %1703 = vrot.lane.b32.xlu0 %v1604, 100
      %v1704 = vpop.permute.xlu0 %1703
      %1705 = vrot.lane.b32.xlu0 %v1606, 100
      %v1706 = vpop.permute.xlu0 %1705
      %v1716 = vsel %vm1405, %v1511, 0
      %v1719 = vsel %vm1405, %v1512, 0
      %v1722 = vsel %vm1405, %v1513, 0
      %v1725 = vsel %vm1405, %v1514, 0
      %v1728 = vsel %vm1405, %v1515, 0
      %v1731 = vsel %vm1405, %v1516, 0
      %v1734 = vsel %vm1405, %v1517, 0
      %v1737 = vsel %vm1405, %v1518, 0
      %v1740 = vsel %vm1405, %v1519, 0
      %v1743 = vsel %vm1405, %v1520, 0
      %v1746 = vsel %vm1405, %v1521, 0
      %v1749 = vsel %vm1405, %v1522, 0
      %v1752 = vsel %vm1405, %v1523, 0
      %v1755 = vsel %vm1405, %v1524, 0
      %v1758 = vsel %vm1405, %v1525, 0
      %v1761 = vsel %vm1405, %v1526, 0
      %1763 = vmatprep.subr.mxu0 0.0
      %1764 = vmatpush1.msra.mxu0 %v1692
      %1765 = vmatprep.subr.mxu0 0.0
      %1766 = vmatpush1.msra.mxu0 %v1694
      %1767 = vmatprep.subr.mxu0 0.0
      %1768 = vmatpush1.msra.mxu0 %v1696
      %1769 = vmatprep.subr.mxu0 0.0
      %1770 = vmatpush1.msra.mxu0 %v1698
      %1771 = vmatprep.subr.mxu0 0.0
      %1772 = vmatpush1.msra.mxu0 %v1700
      %1773 = vmatprep.subr.mxu0 0.0
      %1774 = vmatpush1.msra.mxu0 %v1702
      %1775 = vmatprep.subr.mxu0 0.0
      %1776 = vmatpush1.msra.mxu0 %v1704
      %1777 = vmatprep.subr.mxu0 0.0
      %1778 = vmatpush1.msra.mxu0 %v1706
      %1779 = vmatprep.subr.mxu0 0.0
      %1780 = vmatpush1.msra.mxu0 0.0
      %1781 = vmatprep.subr.mxu0 0.0
      %1782 = vmatpush1.msra.mxu0 0.0
      %1783 = vmatprep.subr.mxu0 0.0
      %1784 = vmatpush1.msra.mxu0 0.0
      %1785 = vmatprep.subr.mxu0 0.0
      %1786 = vmatpush1.msra.mxu0 0.0
      %1787 = vmatprep.subr.mxu0 0.0
      %1788 = vmatpush1.msra.mxu0 0.0
      %1789 = vmatprep.subr.mxu0 0.0
      %1790 = vmatpush1.msra.mxu0 0.0
      %1791 = vmatprep.subr.mxu0 0.0
      %1792 = vmatpush1.msra.mxu0 0.0
      %1793 = vmatprep.subr.mxu0 0.0
      %1794 = vmatpush1.msra.mxu0 0.0
      %1795 = vmatprep.subr.mxu0 0.0
      %1796 = vmatpush1.msra.mxu0 0.0
      %1797 = vmatprep.subr.mxu0 0.0
      %1798 = vmatpush1.msra.mxu0 0.0
      %1799 = vmatprep.subr.mxu0 0.0
      %1800 = vmatpush1.msra.mxu0 0.0
      %1801 = vmatprep.subr.mxu0 0.0
      %1802 = vmatpush1.msra.mxu0 0.0
      %1803 = vmatprep.subr.mxu0 0.0
      %1804 = vmatpush1.msra.mxu0 0.0
      %1805 = vmatprep.subr.mxu0 0.0
      %1806 = vmatpush1.msra.mxu0 0.0
      %1807 = vmatprep.subr.mxu0 0.0
      %1808 = vmatpush1.msra.mxu0 0.0
      %1809 = vmatprep.subr.mxu0 0.0
      %1810 = vmatpush1.msra.mxu0 0.0
      %1811 = vmatprep.subr.mxu0 0.0
      %1812 = vmatpush1.msra.mxu0 0.0
      %1813 = vmatprep.subr.mxu0 0.0
      %1814 = vmatpush1.msra.mxu0 0.0
      %1815 = vmatprep.subr.mxu0 0.0
      %1816 = vmatpush1.msra.mxu0 0.0
      %1817 = vmatprep.subr.mxu0 0.0
      %1818 = vmatpush1.msra.mxu0 0.0
      %1819 = vmatprep.subr.mxu0 0.0
      %1820 = vmatpush1.msra.mxu0 0.0
      %1821 = vmatprep.subr.mxu0 0.0
      %1822 = vmatpush1.msra.mxu0 0.0
      %1823 = vmatprep.subr.mxu0 0.0
      %1824 = vmatpush1.msra.mxu0 0.0
      %1825 = vmatprep.subr.mxu0 0.0
      %1826 = vmatpush1.msra.mxu0 0.0
      %1827 = vmatprep.mubr.f32.mxu0 0.0
      %1828 = vmatmul.mubr.f32.gmra.mrb[0].mxu0 %v1716
      %v1829 = vpop.f32.mrb[0].mxu0
      %v1830 = vadd.f32 %v1610, %v1829
      %v1831 = vpop.f32.mrb[0].mxu0
      %1832 = vmatprep.mubr.f32.mxu0 0.0
      %1833 = vmatmul.mubr.f32.gmra.mrb[0].mxu0 %v1719
      %v1834 = vpop.f32.mrb[0].mxu0
      %v1835 = vadd.f32 %v1615, %v1834
      %v1836 = vpop.f32.mrb[0].mxu0
      %1837 = vmatprep.mubr.f32.mxu0 0.0
      %1838 = vmatmul.mubr.f32.gmra.mrb[0].mxu0 %v1722
      %v1839 = vpop.f32.mrb[0].mxu0
      %v1840 = vadd.f32 %v1620, %v1839
      %v1841 = vpop.f32.mrb[0].mxu0
      %1842 = vmatprep.mubr.f32.mxu0 0.0
      %1843 = vmatmul.mubr.f32.gmra.mrb[0].mxu0 %v1725
      %v1844 = vpop.f32.mrb[0].mxu0
      %v1845 = vadd.f32 %v1625, %v1844
      %v1846 = vpop.f32.mrb[0].mxu0
      %1847 = vmatprep.mubr.f32.mxu0 0.0
      %1848 = vmatmul.mubr.f32.gmra.mrb[0].mxu0 %v1728
      %v1849 = vpop.f32.mrb[0].mxu0
      %v1850 = vadd.f32 %v1630, %v1849
      %v1851 = vpop.f32.mrb[0].mxu0
      %1852 = vmatprep.mubr.f32.mxu0 0.0
      %1853 = vmatmul.mubr.f32.gmra.mrb[0].mxu0 %v1731
      %v1854 = vpop.f32.mrb[0].mxu0
      %v1855 = vadd.f32 %v1635, %v1854
      %v1856 = vpop.f32.mrb[0].mxu0
      %1857 = vmatprep.mubr.f32.mxu0 0.0
      %1858 = vmatmul.mubr.f32.gmra.mrb[0].mxu0 %v1734
      %v1859 = vpop.f32.mrb[0].mxu0
      %v1860 = vadd.f32 %v1640, %v1859
      %v1861 = vpop.f32.mrb[0].mxu0
      %1862 = vmatprep.mubr.f32.mxu0 0.0
      %1863 = vmatmul.mubr.f32.gmra.mrb[0].mxu0 %v1737
      %v1864 = vpop.f32.mrb[0].mxu0
      %v1865 = vadd.f32 %v1645, %v1864
      %v1866 = vpop.f32.mrb[0].mxu0
      %1867 = vmatprep.mubr.f32.mxu0 0.0
      %1868 = vmatmul.mubr.f32.gmra.mrb[0].mxu0 %v1740
      %v1869 = vpop.f32.mrb[0].mxu0
      %v1870 = vadd.f32 %v1650, %v1869
      %v1871 = vpop.f32.mrb[0].mxu0
      %1872 = vmatprep.mubr.f32.mxu0 0.0
      %1873 = vmatmul.mubr.f32.gmra.mrb[0].mxu0 %v1743
      %v1874 = vpop.f32.mrb[0].mxu0
      %v1875 = vadd.f32 %v1655, %v1874
      %v1876 = vpop.f32.mrb[0].mxu0
      %1877 = vmatprep.mubr.f32.mxu0 0.0
      %1878 = vmatmul.mubr.f32.gmra.mrb[0].mxu0 %v1746
      %v1879 = vpop.f32.mrb[0].mxu0
      %v1880 = vadd.f32 %v1660, %v1879
      %v1881 = vpop.f32.mrb[0].mxu0
      %1882 = vmatprep.mubr.f32.mxu0 0.0
      %1883 = vmatmul.mubr.f32.gmra.mrb[0].mxu0 %v1749
      %v1884 = vpop.f32.mrb[0].mxu0
      %v1885 = vadd.f32 %v1665, %v1884
      %v1886 = vpop.f32.mrb[0].mxu0
      %1887 = vmatprep.mubr.f32.mxu0 0.0
      %1888 = vmatmul.mubr.f32.gmra.mrb[0].mxu0 %v1752
      %v1889 = vpop.f32.mrb[0].mxu0
      %v1890 = vadd.f32 %v1670, %v1889
      %v1891 = vpop.f32.mrb[0].mxu0
      %1892 = vmatprep.mubr.f32.mxu0 0.0
      %1893 = vmatmul.mubr.f32.gmra.mrb[0].mxu0 %v1755
      %v1894 = vpop.f32.mrb[0].mxu0
      %v1895 = vadd.f32 %v1675, %v1894
      %v1896 = vpop.f32.mrb[0].mxu0
      %1897 = vmatprep.mubr.f32.mxu0 0.0
      %1898 = vmatmul.mubr.f32.gmra.mrb[0].mxu0 %v1758
      %v1899 = vpop.f32.mrb[0].mxu0
      %v1900 = vadd.f32 %v1680, %v1899
      %v1901 = vpop.f32.mrb[0].mxu0
      %1902 = vmatprep.mubr.f32.mxu0 0.0
      %1903 = vmatmul.mubr.f32.gmra.mrb[0].mxu0 %v1761
      %v1904 = vpop.f32.mrb[0].mxu0
      %v1905 = vadd.f32 %v1685, %v1904
      %v1906 = vpop.f32.mrb[0].mxu0
      %1907 = vdwg.mxu0
      %v1908 = vmax.f32 %v1830, 0.0
      %v1909 = vmax.f32 %v1835, 0.0
      %v1910 = vmax.f32 %v1840, 0.0
      %v1911 = vmax.f32 %v1845, 0.0
      %v1912 = vmax.f32 %v1850, 0.0
      %v1913 = vmax.f32 %v1855, 0.0
      %v1914 = vmax.f32 %v1860, 0.0
      %v1915 = vmax.f32 %v1865, 0.0
      %1916 = vrot.lane.b32.xlu0 %v1908, 32
      %v1917 = vpop.permute.xlu0 %1916
      %v1918 = vsel %vm802, %v1917, %v1908
      %1919 = vrot.lane.b32.xlu0 %v1909, 32
      %v1920 = vpop.permute.xlu0 %1919
      %v1921 = vsel %vm802, %v1920, %v1909
      %1922 = vrot.lane.b32.xlu0 %v1910, 32
      %v1923 = vpop.permute.xlu0 %1922
      %v1924 = vsel %vm802, %v1923, %v1910
      %1925 = vrot.lane.b32.xlu0 %v1911, 32
      %v1926 = vpop.permute.xlu0 %1925
      %v1927 = vsel %vm802, %v1926, %v1911
      %1928 = vrot.lane.b32.xlu0 %v1912, 32
      %v1929 = vpop.permute.xlu0 %1928
      %v1930 = vsel %vm802, %v1929, %v1912
      %1931 = vrot.lane.b32.xlu0 %v1913, 32
      %v1932 = vpop.permute.xlu0 %1931
      %v1933 = vsel %vm802, %v1932, %v1913
      %1934 = vrot.lane.b32.xlu0 %v1914, 32
      %v1935 = vpop.permute.xlu0 %1934
      %v1936 = vsel %vm802, %v1935, %v1914
      %1937 = vrot.lane.b32.xlu0 %v1915, 32
      %v1938 = vpop.permute.xlu0 %1937
      %v1939 = vsel %vm802, %v1938, %v1915
      %1940 = vrot.lane.b32.xlu0 %v1918, 32
      %v1941 = vpop.permute.xlu0 %1940
      %1942 = vrot.lane.b32.xlu0 %v1921, 32
      %v1943 = vpop.permute.xlu0 %1942
      %1944 = vrot.lane.b32.xlu0 %v1924, 32
      %v1945 = vpop.permute.xlu0 %1944
      %1946 = vrot.lane.b32.xlu0 %v1927, 32
      %v1947 = vpop.permute.xlu0 %1946
      %1948 = vrot.lane.b32.xlu0 %v1930, 32
      %v1949 = vpop.permute.xlu0 %1948
      %1950 = vrot.lane.b32.xlu0 %v1933, 32
      %v1951 = vpop.permute.xlu0 %1950
      %1952 = vrot.lane.b32.xlu0 %v1936, 32
      %v1953 = vpop.permute.xlu0 %1952
      %1954 = vrot.lane.b32.xlu0 %v1939, 32
      %v1955 = vpop.permute.xlu0 %1954
      %v1956 = vsel %vm802, %v1941, %v1908
      %v1957 = vsel %vm802, %v1943, %v1909
      %v1958 = vsel %vm802, %v1945, %v1910
      %v1959 = vsel %vm802, %v1947, %v1911
      %v1960 = vsel %vm802, %v1949, %v1912
      %v1961 = vsel %vm802, %v1951, %v1913
      %v1962 = vsel %vm802, %v1953, %v1914
      %v1963 = vsel %vm802, %v1955, %v1915
      %v1964 = vmul.f32 %v1956, %v1589
      %v1965 = vmul.f32 %v1957, %v1589
      %v1966 = vmul.f32 %v1958, %v1589
      %v1967 = vmul.f32 %v1959, %v1589
      %v1968 = vmul.f32 %v1960, %v1589
      %v1969 = vmul.f32 %v1961, %v1589
      %v1970 = vmul.f32 %v1962, %v1589
      %v1971 = vmul.f32 %v1963, %v1589
      %1980 = vrot.lane.b32.xlu0 %v1908, 28
      %v1981 = vpop.permute.xlu0 %1980
      %1982 = vrot.lane.b32.xlu0 %v1909, 28
      %v1983 = vpop.permute.xlu0 %1982
      %1984 = vrot.lane.b32.xlu0 %v1910, 28
      %v1985 = vpop.permute.xlu0 %1984
      %1986 = vrot.lane.b32.xlu0 %v1911, 28
      %v1987 = vpop.permute.xlu0 %1986
      %1988 = vrot.lane.b32.xlu0 %v1912, 28
      %v1989 = vpop.permute.xlu0 %1988
      %1990 = vrot.lane.b32.xlu0 %v1913, 28
      %v1991 = vpop.permute.xlu0 %1990
      %1992 = vrot.lane.b32.xlu0 %v1914, 28
      %v1993 = vpop.permute.xlu0 %1992
      %1994 = vrot.lane.b32.xlu0 %v1915, 28
      %v1995 = vpop.permute.xlu0 %1994
      %1997 = vset.pattern.permute.xlu0 0
      %1998 = vperm.xlu0 %1997, %v1551
      %v1999 = vpop.permute.xlu0 %1998
      %2002 = vset.pattern.permute.xlu0 0
      %2003 = vperm.xlu0 %2002, %v1552
      %v2004 = vpop.permute.xlu0 %2003
      %2007 = vset.pattern.permute.xlu0 0
      %2008 = vperm.xlu0 %2007, %v1553
      %v2009 = vpop.permute.xlu0 %2008
      %2012 = vset.pattern.permute.xlu0 0
      %2013 = vperm.xlu0 %2012, %v1554
      %v2014 = vpop.permute.xlu0 %2013
      %2017 = vset.pattern.permute.xlu0 0
      %2018 = vperm.xlu0 %2017, %v1555
      %v2019 = vpop.permute.xlu0 %2018
      %2022 = vset.pattern.permute.xlu0 0
      %2023 = vperm.xlu0 %2022, %v1556
      %v2024 = vpop.permute.xlu0 %2023
      %2027 = vset.pattern.permute.xlu0 0
      %2028 = vperm.xlu0 %2027, %v1557
      %v2029 = vpop.permute.xlu0 %2028
      %2032 = vset.pattern.permute.xlu0 0
      %2033 = vperm.xlu0 %2032, %v1558
      %v2034 = vpop.permute.xlu0 %2033
      %2044 = vrot.lane.b32.xlu0 %v1964, 100
      %v2045 = vpop.permute.xlu0 %2044
      %2046 = vrot.lane.b32.xlu0 %v1965, 100
      %v2047 = vpop.permute.xlu0 %2046
      %2048 = vrot.lane.b32.xlu0 %v1966, 100
      %v2049 = vpop.permute.xlu0 %2048
      %2050 = vrot.lane.b32.xlu0 %v1967, 100
      %v2051 = vpop.permute.xlu0 %2050
      %2052 = vrot.lane.b32.xlu0 %v1968, 100
      %v2053 = vpop.permute.xlu0 %2052
      %2054 = vrot.lane.b32.xlu0 %v1969, 100
      %v2055 = vpop.permute.xlu0 %2054
      %2056 = vrot.lane.b32.xlu0 %v1970, 100
      %v2057 = vpop.permute.xlu0 %2056
      %2058 = vrot.lane.b32.xlu0 %v1971, 100
      %v2059 = vpop.permute.xlu0 %2058
      %2060 = vrot.lane.b32.xlu0 %v1981, 100
      %v2061 = vpop.permute.xlu0 %2060
      %2062 = vrot.lane.b32.xlu0 %v1983, 100
      %v2063 = vpop.permute.xlu0 %2062
      %2064 = vrot.lane.b32.xlu0 %v1985, 100
      %v2065 = vpop.permute.xlu0 %2064
      %2066 = vrot.lane.b32.xlu0 %v1987, 100
      %v2067 = vpop.permute.xlu0 %2066
      %2068 = vrot.lane.b32.xlu0 %v1989, 100
      %v2069 = vpop.permute.xlu0 %2068
      %2070 = vrot.lane.b32.xlu0 %v1991, 100
      %v2071 = vpop.permute.xlu0 %2070
      %2072 = vrot.lane.b32.xlu0 %v1993, 100
      %v2073 = vpop.permute.xlu0 %2072
      %2074 = vrot.lane.b32.xlu0 %v1995, 100
      %v2075 = vpop.permute.xlu0 %2074
      %2092 = vmatprep.subr.mxu0 0.0
      %2093 = vmatpush1.msra.mxu0 %v2045
      %2094 = vmatprep.subr.mxu0 0.0
      %2095 = vmatpush1.msra.mxu0 %v2047
      %2096 = vmatprep.subr.mxu0 0.0
      %2097 = vmatpush1.msra.mxu0 %v2049
      %2098 = vmatprep.subr.mxu0 0.0
      %2099 = vmatpush1.msra.mxu0 %v2051
      %2100 = vmatprep.subr.mxu0 0.0
      %2101 = vmatpush1.msra.mxu0 %v2053
      %2102 = vmatprep.subr.mxu0 0.0
      %2103 = vmatpush1.msra.mxu0 %v2055
      %2104 = vmatprep.subr.mxu0 0.0
      %2105 = vmatpush1.msra.mxu0 %v2057
      %2106 = vmatprep.subr.mxu0 0.0
      %2107 = vmatpush1.msra.mxu0 %v2059
      %2108 = vmatprep.subr.mxu0 0.0
      %2109 = vmatpush1.msra.mxu0 %v2061
      %2110 = vmatprep.subr.mxu0 0.0
      %2111 = vmatpush1.msra.mxu0 %v2063
      %2112 = vmatprep.subr.mxu0 0.0
      %2113 = vmatpush1.msra.mxu0 %v2065
      %2114 = vmatprep.subr.mxu0 0.0
      %2115 = vmatpush1.msra.mxu0 %v2067
      %2116 = vmatprep.subr.mxu0 0.0
      %2117 = vmatpush1.msra.mxu0 %v2069
      %2118 = vmatprep.subr.mxu0 0.0
      %2119 = vmatpush1.msra.mxu0 %v2071
      %2120 = vmatprep.subr.mxu0 0.0
      %2121 = vmatpush1.msra.mxu0 %v2073
      %2122 = vmatprep.subr.mxu0 0.0
      %2123 = vmatpush1.msra.mxu0 %v2075
      %2124 = vmatprep.subr.mxu0 0.0
      %2125 = vmatpush1.msra.mxu0 0.0
      %2126 = vmatprep.subr.mxu0 0.0
      %2127 = vmatpush1.msra.mxu0 0.0
      %2128 = vmatprep.subr.mxu0 0.0
      %2129 = vmatpush1.msra.mxu0 0.0
      %2130 = vmatprep.subr.mxu0 0.0
      %2131 = vmatpush1.msra.mxu0 0.0
      %2132 = vmatprep.subr.mxu0 0.0
      %2133 = vmatpush1.msra.mxu0 0.0
      %2134 = vmatprep.subr.mxu0 0.0
      %2135 = vmatpush1.msra.mxu0 0.0
      %2136 = vmatprep.subr.mxu0 0.0
      %2137 = vmatpush1.msra.mxu0 0.0
      %2138 = vmatprep.subr.mxu0 0.0
      %2139 = vmatpush1.msra.mxu0 0.0
      %2140 = vmatprep.subr.mxu0 0.0
      %2141 = vmatpush1.msra.mxu0 0.0
      %2142 = vmatprep.subr.mxu0 0.0
      %2143 = vmatpush1.msra.mxu0 0.0
      %2144 = vmatprep.subr.mxu0 0.0
      %2145 = vmatpush1.msra.mxu0 0.0
      %2146 = vmatprep.subr.mxu0 0.0
      %2147 = vmatpush1.msra.mxu0 0.0
      %2148 = vmatprep.subr.mxu0 0.0
      %2149 = vmatpush1.msra.mxu0 0.0
      %2150 = vmatprep.subr.mxu0 0.0
      %2151 = vmatpush1.msra.mxu0 0.0
      %2152 = vmatprep.subr.mxu0 0.0
      %2153 = vmatpush1.msra.mxu0 0.0
      %2154 = vmatprep.subr.mxu0 0.0
      %2155 = vmatpush1.msra.mxu0 0.0
      %2156 = vmatprep.mubr.f32.mxu0 0.0
      %2157 = vmatmul.mubr.f32.gmra.mrb[0].mxu0 %v1543
      %v2158 = vpop.f32.mrb[0].mxu0
      %v2159 = vadd.f32 %v1999, %v2158
      %v2160 = vpop.f32.mrb[0].mxu0
      %2161 = vmatprep.mubr.f32.mxu0 0.0
      %2162 = vmatmul.mubr.f32.gmra.mrb[0].mxu0 %v1544
      %v2163 = vpop.f32.mrb[0].mxu0
      %v2164 = vadd.f32 %v2004, %v2163
      %v2165 = vpop.f32.mrb[0].mxu0
      %2166 = vmatprep.mubr.f32.mxu0 0.0
      %2167 = vmatmul.mubr.f32.gmra.mrb[0].mxu0 %v1545
      %v2168 = vpop.f32.mrb[0].mxu0
      %v2169 = vadd.f32 %v2009, %v2168
      %v2170 = vpop.f32.mrb[0].mxu0
      %2171 = vmatprep.mubr.f32.mxu0 0.0
      %2172 = vmatmul.mubr.f32.gmra.mrb[0].mxu0 %v1546
      %v2173 = vpop.f32.mrb[0].mxu0
      %v2174 = vadd.f32 %v2014, %v2173
      %v2175 = vpop.f32.mrb[0].mxu0
      %2176 = vmatprep.mubr.f32.mxu0 0.0
      %2177 = vmatmul.mubr.f32.gmra.mrb[0].mxu0 %v1547
      %v2178 = vpop.f32.mrb[0].mxu0
      %v2179 = vadd.f32 %v2019, %v2178
      %v2180 = vpop.f32.mrb[0].mxu0
      %2181 = vmatprep.mubr.f32.mxu0 0.0
      %2182 = vmatmul.mubr.f32.gmra.mrb[0].mxu0 %v1548
      %v2183 = vpop.f32.mrb[0].mxu0
      %v2184 = vadd.f32 %v2024, %v2183
      %v2185 = vpop.f32.mrb[0].mxu0
      %2186 = vmatprep.mubr.f32.mxu0 0.0
      %2187 = vmatmul.mubr.f32.gmra.mrb[0].mxu0 %v1549
      %v2188 = vpop.f32.mrb[0].mxu0
      %v2189 = vadd.f32 %v2029, %v2188
      %v2190 = vpop.f32.mrb[0].mxu0
      %2191 = vmatprep.mubr.f32.mxu0 0.0
      %2192 = vmatmul.mubr.f32.gmra.mrb[0].mxu0 %v1550
      %v2193 = vpop.f32.mrb[0].mxu0
      %v2194 = vadd.f32 %v2034, %v2193
      %v2195 = vpop.f32.mrb[0].mxu0
      %2196 = vdwg.mxu0
      %v2197 = vmax.f32 %v2159, 0.0
      %v2198 = vmax.f32 %v2164, 0.0
      %v2199 = vmax.f32 %v2169, 0.0
      %v2200 = vmax.f32 %v2174, 0.0
      %v2201 = vmax.f32 %v2179, 0.0
      %v2202 = vmax.f32 %v2184, 0.0
      %v2203 = vmax.f32 %v2189, 0.0
      %v2204 = vmax.f32 %v2194, 0.0
      %v2205 = vadd.f32 %v2197, %v1870
      %v2206 = vadd.f32 %v2198, %v1875
      %v2207 = vadd.f32 %v2199, %v1880
      %v2208 = vadd.f32 %v2200, %v1885
      %v2209 = vadd.f32 %v2201, %v1890
      %v2210 = vadd.f32 %v2202, %v1895
      %v2211 = vadd.f32 %v2203, %v1900
      %v2212 = vadd.f32 %v2204, %v1905
      %v2213 = vld [vmem:[%s1] sm:$0xff]
      %v2214 = vld [vmem:[%s1 + $0x8] sm:$0xff]
      %v2215 = vld [vmem:[%s1 + $0x10] sm:$0xff]
      %v2216 = vld [vmem:[%s1 + $0x18] sm:$0xff]
      %v2218 = vsel %vm992, %v2205, 0
      %v2221 = vsel %vm992, %v2206, 0
      %v2224 = vsel %vm992, %v2207, 0
      %v2227 = vsel %vm992, %v2208, 0
      %v2230 = vsel %vm992, %v2209, 0
      %v2233 = vsel %vm992, %v2210, 0
      %v2236 = vsel %vm992, %v2211, 0
      %v2239 = vsel %vm992, %v2212, 0
      %2241 = vmatprep.subr.mxu0 0.0
      %2242 = vmatpush1.msra.mxu0 %v2213
      %2243 = vmatprep.subr.mxu0 0.0
      %2244 = vmatpush1.msra.mxu0 %v2214
      %2245 = vmatprep.subr.mxu0 0.0
      %2246 = vmatpush1.msra.mxu0 %v2215
      %2247 = vmatprep.subr.mxu0 0.0
      %2248 = vmatpush1.msra.mxu0 %v2216
      %2249 = vmatprep.subr.mxu0 0.0
      %2250 = vmatpush1.msra.mxu0 0.0
      %2251 = vmatprep.subr.mxu0 0.0
      %2252 = vmatpush1.msra.mxu0 0.0
      %2253 = vmatprep.subr.mxu0 0.0
      %2254 = vmatpush1.msra.mxu0 0.0
      %2255 = vmatprep.subr.mxu0 0.0
      %2256 = vmatpush1.msra.mxu0 0.0
      %2257 = vmatprep.subr.mxu0 0.0
      %2258 = vmatpush1.msra.mxu0 0.0
      %2259 = vmatprep.subr.mxu0 0.0
      %2260 = vmatpush1.msra.mxu0 0.0
      %2261 = vmatprep.subr.mxu0 0.0
      %2262 = vmatpush1.msra.mxu0 0.0
      %2263 = vmatprep.subr.mxu0 0.0
      %2264 = vmatpush1.msra.mxu0 0.0
      %2265 = vmatprep.subr.mxu0 0.0
      %2266 = vmatpush1.msra.mxu0 0.0
      %2267 = vmatprep.subr.mxu0 0.0
      %2268 = vmatpush1.msra.mxu0 0.0
      %2269 = vmatprep.subr.mxu0 0.0
      %2270 = vmatpush1.msra.mxu0 0.0
      %2271 = vmatprep.subr.mxu0 0.0
      %2272 = vmatpush1.msra.mxu0 0.0
      %2273 = vmatprep.subr.mxu0 0.0
      %2274 = vmatpush1.msra.mxu0 0.0
      %2275 = vmatprep.subr.mxu0 0.0
      %2276 = vmatpush1.msra.mxu0 0.0
      %2277 = vmatprep.subr.mxu0 0.0
      %2278 = vmatpush1.msra.mxu0 0.0
      %2279 = vmatprep.subr.mxu0 0.0
      %2280 = vmatpush1.msra.mxu0 0.0
      %2281 = vmatprep.subr.mxu0 0.0
      %2282 = vmatpush1.msra.mxu0 0.0
      %2283 = vmatprep.subr.mxu0 0.0
      %2284 = vmatpush1.msra.mxu0 0.0
      %2285 = vmatprep.subr.mxu0 0.0
      %2286 = vmatpush1.msra.mxu0 0.0
      %2287 = vmatprep.subr.mxu0 0.0
      %2288 = vmatpush1.msra.mxu0 0.0
      %2289 = vmatprep.subr.mxu0 0.0
      %2290 = vmatpush1.msra.mxu0 0.0
      %2291 = vmatprep.subr.mxu0 0.0
      %2292 = vmatpush1.msra.mxu0 0.0
      %2293 = vmatprep.subr.mxu0 0.0
      %2294 = vmatpush1.msra.mxu0 0.0
      %2295 = vmatprep.subr.mxu0 0.0
      %2296 = vmatpush1.msra.mxu0 0.0
      %2297 = vmatprep.subr.mxu0 0.0
      %2298 = vmatpush1.msra.mxu0 0.0
      %2299 = vmatprep.subr.mxu0 0.0
      %2300 = vmatpush1.msra.mxu0 0.0
      %2301 = vmatprep.subr.mxu0 0.0
      %2302 = vmatpush1.msra.mxu0 0.0
      %2303 = vmatprep.subr.mxu0 0.0
      %2304 = vmatpush1.msra.mxu0 0.0
      %2305 = vmatprep.mubr.f32.mxu0 0.0
      %2306 = vmatmul.mubr.f32.gmra.mrb[0].mxu0 %v2218
      %v2307 = vpop.f32.mrb[0].mxu0
      %v2308 = vadd.f32 0.0, %v2307
      %v2309 = vpop.f32.mrb[0].mxu0
      %2310 = vmatprep.mubr.f32.mxu0 0.0
      %2311 = vmatmul.mubr.f32.gmra.mrb[0].mxu0 %v2221
      %v2312 = vpop.f32.mrb[0].mxu0
      %v2313 = vadd.f32 0.0, %v2312
      %v2314 = vpop.f32.mrb[0].mxu0
      %2315 = vmatprep.mubr.f32.mxu0 0.0
      %2316 = vmatmul.mubr.f32.gmra.mrb[0].mxu0 %v2224
      %v2317 = vpop.f32.mrb[0].mxu0
      %v2318 = vadd.f32 0.0, %v2317
      %v2319 = vpop.f32.mrb[0].mxu0
      %2320 = vmatprep.mubr.f32.mxu0 0.0
      %2321 = vmatmul.mubr.f32.gmra.mrb[0].mxu0 %v2227
      %v2322 = vpop.f32.mrb[0].mxu0
      %v2323 = vadd.f32 0.0, %v2322
      %v2324 = vpop.f32.mrb[0].mxu0
      %2325 = vmatprep.mubr.f32.mxu0 0.0
      %2326 = vmatmul.mubr.f32.gmra.mrb[0].mxu0 %v2230
      %v2327 = vpop.f32.mrb[0].mxu0
      %v2328 = vadd.f32 0.0, %v2327
      %v2329 = vpop.f32.mrb[0].mxu0
      %2330 = vmatprep.mubr.f32.mxu0 0.0
      %2331 = vmatmul.mubr.f32.gmra.mrb[0].mxu0 %v2233
      %v2332 = vpop.f32.mrb[0].mxu0
      %v2333 = vadd.f32 0.0, %v2332
      %v2334 = vpop.f32.mrb[0].mxu0
      %2335 = vmatprep.mubr.f32.mxu0 0.0
      %2336 = vmatmul.mubr.f32.gmra.mrb[0].mxu0 %v2236
      %v2337 = vpop.f32.mrb[0].mxu0
      %v2338 = vadd.f32 0.0, %v2337
      %v2339 = vpop.f32.mrb[0].mxu0
      %2340 = vmatprep.mubr.f32.mxu0 0.0
      %2341 = vmatmul.mubr.f32.gmra.mrb[0].mxu0 %v2239
      %v2342 = vpop.f32.mrb[0].mxu0
      %v2343 = vadd.f32 0.0, %v2342
      %v2344 = vpop.f32.mrb[0].mxu0
      %2345 = vdwg.mxu0
      %v2346 = vld [vmem:[%s773] sm:$0xff]
      %v2347 = vld [vmem:[%s773 + $0x8] sm:$0xf]
      %v2349 = vsel %vm1405, %v2346, 0
      %v2352 = vsel %vm1405, %v2347, 0
      %2354 = vmatprep.subr.mxu0 0.0
      %2355 = vmatpush1.msra.mxu0 %v2308
      %2356 = vmatprep.subr.mxu0 0.0
      %2357 = vmatpush1.msra.mxu0 %v2313
      %2358 = vmatprep.subr.mxu0 0.0
      %2359 = vmatpush1.msra.mxu0 %v2318
      %2360 = vmatprep.subr.mxu0 0.0
      %2361 = vmatpush1.msra.mxu0 %v2323
      %2362 = vmatprep.subr.mxu0 0.0
      %2363 = vmatpush1.msra.mxu0 %v2328
      %2364 = vmatprep.subr.mxu0 0.0
      %2365 = vmatpush1.msra.mxu0 %v2333
      %2366 = vmatprep.subr.mxu0 0.0
      %2367 = vmatpush1.msra.mxu0 %v2338
      %2368 = vmatprep.subr.mxu0 0.0
      %2369 = vmatpush1.msra.mxu0 %v2343
      %2370 = vmatprep.subr.mxu0 0.0
      %2371 = vmatpush1.msra.mxu0 0.0
      %2372 = vmatprep.subr.mxu0 0.0
      %2373 = vmatpush1.msra.mxu0 0.0
      %2374 = vmatprep.subr.mxu0 0.0
      %2375 = vmatpush1.msra.mxu0 0.0
      %2376 = vmatprep.subr.mxu0 0.0
      %2377 = vmatpush1.msra.mxu0 0.0
      %2378 = vmatprep.subr.mxu0 0.0
      %2379 = vmatpush1.msra.mxu0 0.0
      %2380 = vmatprep.subr.mxu0 0.0
      %2381 = vmatpush1.msra.mxu0 0.0
      %2382 = vmatprep.subr.mxu0 0.0
      %2383 = vmatpush1.msra.mxu0 0.0
      %2384 = vmatprep.subr.mxu0 0.0
      %2385 = vmatpush1.msra.mxu0 0.0
      %2386 = vmatprep.subr.mxu0 0.0
      %2387 = vmatpush1.msra.mxu0 0.0
      %2388 = vmatprep.subr.mxu0 0.0
      %2389 = vmatpush1.msra.mxu0 0.0
      %2390 = vmatprep.subr.mxu0 0.0
      %2391 = vmatpush1.msra.mxu0 0.0
      %2392 = vmatprep.subr.mxu0 0.0
      %2393 = vmatpush1.msra.mxu0 0.0
      %2394 = vmatprep.subr.mxu0 0.0
      %2395 = vmatpush1.msra.mxu0 0.0
      %2396 = vmatprep.subr.mxu0 0.0
      %2397 = vmatpush1.msra.mxu0 0.0
      %2398 = vmatprep.subr.mxu0 0.0
      %2399 = vmatpush1.msra.mxu0 0.0
      %2400 = vmatprep.subr.mxu0 0.0
      %2401 = vmatpush1.msra.mxu0 0.0
      %2402 = vmatprep.subr.mxu0 0.0
      %2403 = vmatpush1.msra.mxu0 0.0
      %2404 = vmatprep.subr.mxu0 0.0
      %2405 = vmatpush1.msra.mxu0 0.0
      %2406 = vmatprep.subr.mxu0 0.0
      %2407 = vmatpush1.msra.mxu0 0.0
      %2408 = vmatprep.subr.mxu0 0.0
      %2409 = vmatpush1.msra.mxu0 0.0
      %2410 = vmatprep.subr.mxu0 0.0
      %2411 = vmatpush1.msra.mxu0 0.0
      %2412 = vmatprep.subr.mxu0 0.0
      %2413 = vmatpush1.msra.mxu0 0.0
      %2414 = vmatprep.subr.mxu0 0.0
      %2415 = vmatpush1.msra.mxu0 0.0
      %2416 = vmatprep.subr.mxu0 0.0
      %2417 = vmatpush1.msra.mxu0 0.0
      %2418 = vmatprep.mubr.f32.mxu0 0.0
      %2419 = vmatmul.mubr.f32.gmra.mrb[0].mxu0 %v2349
      %v2420 = vpop.f32.mrb[0].mxu0
      %v2421 = vadd.f32 0.0, %v2420
      %v2422 = vpop.f32.mrb[0].mxu0
      %2423 = vmatprep.mubr.f32.mxu0 0.0
      %2424 = vmatmul.mubr.f32.gmra.mrb[0].mxu0 %v2352
      %v2425 = vpop.f32.mrb[0].mxu0
      %v2426 = vadd.f32 0.0, %v2425
      %v2427 = vpop.f32.mrb[0].mxu0
      %2428 = vdwg.mxu0
      %vm2429 = vcmask 15360
      %2430 = vst.msk [vmem:[%s778] sm:$0xff] %vm2429, %v2421
      %vm2431 = vcmask 11264
      %2432 = vst.msk [vmem:[%s778 + $0x8] sm:$0xf] %vm2431, %v2426
      %p2433 = scmp.lt.s32.totalorder %s27, 1
      %s2434 = scalar_select %p2433, %s27, 1
      %s2435 = smul.addr %s2434, 2
      %s2436 = smul.addr %s2435, 8
      %s2437 = scalar_lea.vmem %s16, %s2436
      // Predicated region
      $region85: #{_lambda_.1} parent=83 // pred_check
        %p2438 = pneg %p451
      $region86: #{_lambda_.1} parent=83 // pred_check_branch
        %2440 = sbr.rel (%p2438) target = $region88
      $region87: #{_lambda_.1} parent=83 // pred_region
        _
      $region88: #{_lambda_.1} parent=83 // pred_fallthru
        _
    $region84: #{_lambda_.1} parent=5 // pred_fallthru
      _
    %p2441 = scmp.le.s32.totalorder 2, %s22
    // Predicated region
    $region89: #{_lambda_.1} parent=5 // pred_check
      %p2442 = pneg %p2441
    $region90: #{_lambda_.1} parent=5 // pred_check_branch
      %2444 = sbr.rel (%p2442) target = $region92
    $region91: #{_lambda_.1} parent=5 // pred_region
      %s2445 = ssub.s32 %s22, 2
      // Predicated region
      $region93: #{_lambda_.1} parent=91 // pred_check
        %p2446 = pneg %p457
      $region94: #{_lambda_.1} parent=91 // pred_check_branch
        %2448 = sbr.rel (%p2446) target = $region96
      $region95: #{_lambda_.1} parent=91 // pred_region
        %p2449 = scmp.lt.s32.totalorder %s28, 1
        %s2450 = scalar_select %p2449, %s28, 1
        %s2451 = smul.addr %s2450, 2
        %s2452 = smul.addr %s2451, 8
        %s2453 = scalar_lea.vmem %s16, %s2452
      $region96: #{_lambda_.1} parent=91 // pred_fallthru
        _
    $region92: #{_lambda_.1} parent=5 // pred_fallthru
      _
  $region6: #{_lambda_.1} parent=0 // loop_footer
    %s26 = sadd.s32 1, %s22
  $region7: #{_lambda_.1} parent=0 // loop_footer_branch
    %21 = sbr.rel target = $region3
  $region8: #{_lambda_.1} parent=0 // loop_exit
    _

</llo_original>
